<compile_context>
chip_gen: v5e
topology: v5e:2x2
jax: 0.10.0
libtpu: 0.0.40
codegen_flags: <defaults>
</compile_context>

<pallas_src>
import functools

import jax
import jax.numpy as jnp
from jax import lax
from jax.experimental import pallas as pl
from jax.experimental.pallas import tpu as pltpu


# --------------------------------------------------------------------------
# Fused kernel: one grid step == one encoder layer; activation stays in VMEM.
# --------------------------------------------------------------------------
def _encoder_kernel(x_ref, pos_ref, mask_ref,
                    wqkv_ref, bqkv_ref, wo_ref, bo_ref,
                    w1_ref, b1_ref, w2_ref, b2_ref,
                    g1_ref, be1_ref, g2_ref, be2_ref,
                    o_ref, acc_ref, ctx_ref, *, n_heads):
    layer = pl.program_id(0)
    n_layers = pl.num_programs(0)
    B, S, D = x_ref.shape
    M = B * S
    H = n_heads
    dk = D // H
    scale = 1.0 / (dk ** 0.5)
    f32 = jnp.float32
    bf16 = jnp.bfloat16

    # --- grid step 0: fold in the learnable position encoding (embed dropout = eval id).
    # TODO(synk): training-mode dropout (stochastic mask via pltpu.prng_*) not emitted.
    @pl.when(layer == 0)
    def _():
        acc_ref[...] = (x_ref[...] + pos_ref[...][None]).reshape(M, D)

    x2 = acc_ref[...]                                     # (M, D) f32, VMEM-resident

    # --- fused QKV projection: bf16 operands on the MXU, f32 accumulation ---
    qkv = jnp.dot(x2.astype(bf16), wqkv_ref[0],
                  preferred_element_type=f32) + bqkv_ref[0]          # (M, 3D) f32
    q = qkv[:, 0 * D:1 * D].reshape(B, S, D)
    k = qkv[:, 1 * D:2 * D].reshape(B, S, D)
    v = qkv[:, 2 * D:3 * D].reshape(B, S, D)

    add_mask = mask_ref[...][None]                        # (1, S, S) hoisted additive mask

    # --- per-head attention, batched over B via 3-D einsums (single batch dim: the safe
    #     Mosaic dot_general path).  Head contexts are assembled in VMEM so the output
    #     projection below is ONE (M,D)@(D,D) GEMM instead of H accumulated K=8 dots. ---
    for h in range(H):                                    # H static, small unroll
        qh = q[:, :, h * dk:(h + 1) * dk].astype(bf16)    # (B, S, dk)
        kh = k[:, :, h * dk:(h + 1) * dk].astype(bf16)
        vh = v[:, :, h * dk:(h + 1) * dk].astype(bf16)
        s = jnp.einsum('bqd,bkd->bqk', qh, kh,
                       preferred_element_type=f32) * scale + add_mask   # (B, S, S) f32
        s = s - jnp.max(s, axis=-1, keepdims=True)
        p = jnp.exp(s)
        p = p * pl.reciprocal(jnp.sum(p, axis=-1, keepdims=True), approx=True)
        oh = jnp.einsum('bqk,bkd->bqd', p.astype(bf16), vh,
                        preferred_element_type=f32)       # (B, S, dk) f32
        ctx_ref[:, h * dk:(h + 1) * dk] = oh.reshape(M, dk)

    # --- single output projection over the full head dimension (K = D) ---
    attn = jnp.dot(ctx_ref[...].astype(bf16), wo_ref[0],
                   preferred_element_type=f32) + bo_ref[0]            # (M, D)

    def _layernorm(z, g, b):
        mu = jnp.mean(z, axis=-1, keepdims=True)
        var = jnp.mean((z - mu) ** 2, axis=-1, keepdims=True)
        return (z - mu) * lax.rsqrt(var + f32(1e-5)) * g + b

    # --- Post-LN residual block 1 ---
    x1 = _layernorm(x2 + attn, g1_ref[0], be1_ref[0])

    # --- feed-forward (bf16 matmuls, f32 accumulate / activation math) ---
    h1 = jnp.dot(x1.astype(bf16), w1_ref[0], preferred_element_type=f32) + b1_ref[0]
    h1 = jnp.maximum(h1, f32(0.0))
    ff = jnp.dot(h1.astype(bf16), w2_ref[0], preferred_element_type=f32) + b2_ref[0]

    # --- Post-LN residual block 2 ---
    y = _layernorm(x1 + ff, g2_ref[0], be2_ref[0])
    acc_ref[...] = y

    @pl.when(layer == n_layers - 1)
    def _():
        # TODO(synk): lane-dense (., 128) output slab skipped — at D=32 it needs a
        # cross-lane (M,D)->(M*D/128,128) relayout inside the kernel (risky reshape
        # lowering) and this store executes exactly once per forward (~2 KB).
        o_ref[...] = y.reshape(B, S, D)


# --------------------------------------------------------------------------
# Wrapper: a single pallas_call for the whole Encoder forward.
# --------------------------------------------------------------------------
def encoder_forward(x, params, n_heads):
    B, S, D = x.shape
    L = params["wqkv"].shape[0]
    d_fc = params["w1"].shape[2]
    M = B * S
    H = n_heads
    bf16 = jnp.bfloat16

    pos = params["pos_embed"][:S].astype(jnp.float32)     # LearnablePositionEncoding slice
    # additive causal ("subsequence") mask, hoisted out of the per-layer body
    tril = jnp.tril(jnp.ones((S, S), dtype=bool))
    add_mask = jnp.where(tril, 0.0, -1e9).astype(jnp.float32)

    # matmul weights streamed in bf16 (halves weight DMA, native MXU path);
    # biases / LayerNorm params stay f32.
    wqkv = params["wqkv"].astype(bf16)
    wo = params["wo"].astype(bf16)
    w1 = params["w1"].astype(bf16)
    w2 = params["w2"].astype(bf16)

    def lspec(a):                                          # per-layer stacked weight spec
        return pl.BlockSpec((1,) + tuple(a.shape[1:]), lambda l: (l, 0, 0))

    in_specs = [
        pl.BlockSpec((B, S, D), lambda l: (0, 0, 0)),      # x    (constant block)
        pl.BlockSpec((S, D), lambda l: (0, 0)),            # pos
        pl.BlockSpec((S, S), lambda l: (0, 0)),            # additive causal mask
        lspec(wqkv), lspec(params["bqkv"]),
        lspec(wo), lspec(params["bo"]),
        lspec(w1), lspec(params["b1"]),
        lspec(w2), lspec(params["b2"]),
        lspec(params["ln1_g"]), lspec(params["ln1_b"]),
        lspec(params["ln2_g"]), lspec(params["ln2_b"]),
    ]

    flops_layer = (2 * M * D * 3 * D            # fused QKV projection
                   + 4 * B * S * S * D          # scores + p @ v (all heads)
                   + 2 * M * D * D              # output projection
                   + 4 * M * D * d_fc)          # FFN (two matmuls)
    weight_bytes = sum(int(a.size) * a.dtype.itemsize for a in
                       (wqkv, params["bqkv"], wo, params["bo"], w1, params["b1"],
                        w2, params["b2"], params["ln1_g"], params["ln1_b"],
                        params["ln2_g"], params["ln2_b"]))
    cost = pl.CostEstimate(
        flops=int(L * flops_layer),
        transcendentals=int(L * (B * H * S * S + B * H * S + 2 * M)),
        bytes_accessed=int(2 * B * S * D * 4 + weight_bytes),
    )

    kernel = functools.partial(_encoder_kernel, n_heads=n_heads)
    # TODO(synk): for production sizes (large D/d_fc) add an inner grid axis tiling d_fc
    # (and the 3D axis of wqkv) so per-layer weight blocks fit double-buffered in VMEM
    # (v7x: 64 MiB physical), and on v7x add a leading "parallel" batch/row grid axis to
    # use the second TensorCore.
    return pl.pallas_call(
        kernel,
        out_shape=jax.ShapeDtypeStruct((B, S, D), jnp.float32),
        grid=(L,),
        in_specs=in_specs,
        out_specs=pl.BlockSpec((B, S, D), lambda l: (0, 0, 0)),
        scratch_shapes=[pltpu.VMEM((M, D), jnp.float32),    # resident activation
                        pltpu.VMEM((M, D), jnp.float32)],   # per-layer attention context
        compiler_params=pltpu.CompilerParams(
            dimension_semantics=("arbitrary",),              # layers are sequential
            vmem_limit_bytes=64 * 1024 * 1024),
        cost_estimate=cost,
    )(x.astype(jnp.float32), pos, add_mask,
      wqkv, params["bqkv"], wo, params["bo"],
      w1, params["b1"], w2, params["b2"],
      params["ln1_g"], params["ln1_b"], params["ln2_g"], params["ln2_b"])


# --------------------------------------------------------------------------
# Pure-JAX reference (mirrors the kernel's bf16 matmul / f32 accumulate math)
# --------------------------------------------------------------------------
def encoder_reference(x, params, n_heads):
    B, S, D = x.shape
    H = n_heads
    dk = D // H
    f32 = jnp.float32
    bf16 = jnp.bfloat16
    h_ = (x + params["pos_embed"][:S][None]).astype(f32)
    add_mask = jnp.where(jnp.tril(jnp.ones((S, S), bool)), 0.0, -1e9).astype(f32)

    def ln(z, g, b):
        mu = z.mean(-1, keepdims=True)
        var = ((z - mu) ** 2).mean(-1, keepdims=True)
        return (z - mu) / jnp.sqrt(var + 1e-5) * g + b

    for l in range(params["wqkv"].shape[0]):
        qkv = jnp.dot(h_.reshape(B * S, D).astype(bf16),
                      params["wqkv"][l].astype(bf16),
                      preferred_element_type=f32) + params["bqkv"][l]
        q, k, v = jnp.split(qkv.reshape(B, S, 3 * D), 3, axis=-1)
        qh = q.reshape(B, S, H, dk).transpose(0, 2, 1, 3)
        kh = k.reshape(B, S, H, dk).transpose(0, 2, 1, 3)
        vh = v.reshape(B, S, H, dk).transpose(0, 2, 1, 3)
        s = jnp.einsum('bhqd,bhkd->bhqk', qh.astype(bf16), kh.astype(bf16),
                       preferred_element_type=f32) / jnp.sqrt(f32(dk))
        s = s + add_mask[None, None]
        p = jax.nn.softmax(s, axis=-1)
        o = jnp.einsum('bhqk,bhkd->bhqd', p.astype(bf16), vh.astype(bf16),
                       preferred_element_type=f32)
        o = o.transpose(0, 2, 1, 3).reshape(B * S, D)
        a = jnp.dot(o.astype(bf16), params["wo"][l].astype(bf16),
                    preferred_element_type=f32) + params["bo"][l]
        x1 = ln(h_ + a.reshape(B, S, D), params["ln1_g"][l], params["ln1_b"][l])
        h1 = jnp.dot(x1.reshape(B * S, D).astype(bf16), params["w1"][l].astype(bf16),
                     preferred_element_type=f32) + params["b1"][l]
        h1 = jax.nn.relu(h1)
        ff = jnp.dot(h1.astype(bf16), params["w2"][l].astype(bf16),
                     preferred_element_type=f32) + params["b2"][l]
        h_ = ln(x1 + ff.reshape(B, S, D), params["ln2_g"][l], params["ln2_b"][l])
    return h_


# --------------------------------------------------------------------------
# Deterministic parameter init (synthetic, layer-stacked)
# --------------------------------------------------------------------------
def init_params(key, d, d_fc, n_heads, n_layers, posenc_buffer_size):
    ks = jax.random.split(key, 5)
    return {
        "pos_embed": 0.02 * jax.random.normal(ks[0], (posenc_buffer_size, d), jnp.float32),
        "wqkv": 0.05 * jax.random.normal(ks[1], (n_layers, d, 3 * d), jnp.float32),
        "bqkv": jnp.zeros((n_layers, 1, 3 * d), jnp.float32),
        "wo": 0.05 * jax.random.normal(ks[2], (n_layers, d, d), jnp.float32),
        "bo": jnp.zeros((n_layers, 1, d), jnp.float32),
        "w1": 0.05 * jax.random.normal(ks[3], (n_layers, d, d_fc), jnp.float32),
        "b1": jnp.zeros((n_layers, 1, d_fc), jnp.float32),
        "w2": 0.05 * jax.random.normal(ks[4], (n_layers, d_fc, d), jnp.float32),
        "b2": jnp.zeros((n_layers, 1, d), jnp.float32),
        "ln1_g": jnp.ones((n_layers, 1, d), jnp.float32),
        "ln1_b": jnp.zeros((n_layers, 1, d), jnp.float32),
        "ln2_g": jnp.ones((n_layers, 1, d), jnp.float32),
        "ln2_b": jnp.zeros((n_layers, 1, d), jnp.float32),
    }


# --------------------------------------------------------------------------
# Main
# --------------------------------------------------------------------------
if __name__ == "__main__":
    # Small shapes consistent with the module: d=32, d_fc=64, n_heads=4,
    # n_layers=2, posenc_buffer_size=16; input (batch=2, seq=8, d=32).
    B, S, D = 2, 8, 32
    d_fc, n_heads, n_layers, posenc_buffer = 64, 4, 2, 16

    key = jax.random.PRNGKey(0)
    k_x, k_p = jax.random.split(key)
    x = jax.random.normal(k_x, (B, S, D), jnp.float32)
    params = init_params(k_p, D, d_fc, n_heads, n_layers, posenc_buffer)

    out = jax.block_until_ready(encoder_forward(x, params, n_heads))
    assert out.shape == (B, S, D) and out.dtype == jnp.float32
    assert bool(jnp.all(jnp.isfinite(out)))

    ref = encoder_reference(x, params, n_heads)
    err = float(jnp.max(jnp.abs(out - ref)))
    assert bool(jnp.allclose(out, ref, atol=2e-2, rtol=2e-2)), err
    print("KERNEL_OK")
</pallas_src>

<mosaic_0001>
module attributes {stable_mosaic.version = 11 : i64} {
  func.func @_encoder_kernel(%arg0: i32, %arg1: memref<2x8x32xf32, #tpu.memory_space<vmem>>, %arg2: memref<8x32xf32, #tpu.memory_space<vmem>>, %arg3: memref<8x8xf32, #tpu.memory_space<vmem>>, %arg4: memref<1x32x96xbf16, #tpu.memory_space<vmem>>, %arg5: memref<1x1x96xf32, #tpu.memory_space<vmem>>, %arg6: memref<1x32x32xbf16, #tpu.memory_space<vmem>>, %arg7: memref<1x1x32xf32, #tpu.memory_space<vmem>>, %arg8: memref<1x32x64xbf16, #tpu.memory_space<vmem>>, %arg9: memref<1x1x64xf32, #tpu.memory_space<vmem>>, %arg10: memref<1x64x32xbf16, #tpu.memory_space<vmem>>, %arg11: memref<1x1x32xf32, #tpu.memory_space<vmem>>, %arg12: memref<1x1x32xf32, #tpu.memory_space<vmem>>, %arg13: memref<1x1x32xf32, #tpu.memory_space<vmem>>, %arg14: memref<1x1x32xf32, #tpu.memory_space<vmem>>, %arg15: memref<1x1x32xf32, #tpu.memory_space<vmem>>, %arg16: memref<2x8x32xf32, #tpu.memory_space<vmem>>, %arg17: memref<16x32xf32, #tpu.memory_space<vmem>>, %arg18: memref<16x32xf32, #tpu.memory_space<vmem>>) attributes {dimension_semantics = [#tpu.dimension_semantics<arbitrary>], iteration_bounds = array<i64: 2>, scalar_prefetch = 0 : i64, scratch_operands = 2 : i64, tpu.core_type = #tpu.core_type<tc>, window_params = [{pipeline_mode = #tpu.pipeline_mode<synchronous>, transform_indices = @transform_0, window_bounds = array<i64: 2, 8, 32>}, {pipeline_mode = #tpu.pipeline_mode<synchronous>, transform_indices = @transform_1, window_bounds = array<i64: 8, 32>}, {pipeline_mode = #tpu.pipeline_mode<synchronous>, transform_indices = @transform_2, window_bounds = array<i64: 8, 8>}, {transform_indices = @transform_3, window_bounds = array<i64: 1, 32, 96>}, {transform_indices = @transform_4, window_bounds = array<i64: 1, 1, 96>}, {transform_indices = @transform_5, window_bounds = array<i64: 1, 32, 32>}, {transform_indices = @transform_6, window_bounds = array<i64: 1, 1, 32>}, {transform_indices = @transform_7, window_bounds = array<i64: 1, 32, 64>}, {transform_indices = @transform_8, window_bounds = array<i64: 1, 1, 64>}, {transform_indices = @transform_9, window_bounds = array<i64: 1, 64, 32>}, {transform_indices = @transform_10, window_bounds = array<i64: 1, 1, 32>}, {transform_indices = @transform_11, window_bounds = array<i64: 1, 1, 32>}, {transform_indices = @transform_12, window_bounds = array<i64: 1, 1, 32>}, {transform_indices = @transform_13, window_bounds = array<i64: 1, 1, 32>}, {transform_indices = @transform_14, window_bounds = array<i64: 1, 1, 32>}, {pipeline_mode = #tpu.pipeline_mode<synchronous>, transform_indices = @transform_15, window_bounds = array<i64: 2, 8, 32>}]} {
    %c0_i32 = arith.constant 0 : i32
    %0 = arith.cmpi eq, %arg0, %c0_i32 : i32
    %1 = arith.extui %0 : i1 to i32
    %c0_i32_0 = arith.constant 0 : i32
    %2 = arith.cmpi ne, %1, %c0_i32_0 : i32
    scf.if %2 {
      %c0_84 = arith.constant 0 : index
      %c0_85 = arith.constant 0 : index
      %c0_86 = arith.constant 0 : index
      %205 = vector.load %arg1[%c0_84, %c0_85, %c0_86] : memref<2x8x32xf32, #tpu.memory_space<vmem>>, vector<2x8x32xf32>
      %c0_87 = arith.constant 0 : index
      %c0_88 = arith.constant 0 : index
      %206 = vector.load %arg2[%c0_87, %c0_88] : memref<8x32xf32, #tpu.memory_space<vmem>>, vector<8x32xf32>
      %207 = vector.shape_cast %206 : vector<8x32xf32> to vector<1x8x32xf32>
      %208 = vector.broadcast %207 : vector<1x8x32xf32> to vector<2x8x32xf32>
      %209 = arith.addf %205, %208 : vector<2x8x32xf32>
      %210 = vector.shape_cast %209 : vector<2x8x32xf32> to vector<16x32xf32>
      %c0_89 = arith.constant 0 : index
      %c0_90 = arith.constant 0 : index
      %211 = vector.load %arg17[%c0_89, %c0_90] : memref<16x32xf32, #tpu.memory_space<vmem>>, vector<16x32xf32>
      tpu.vector_store %arg17[%c0_89, %c0_90], %210 {strides = array<i32>} : memref<16x32xf32, #tpu.memory_space<vmem>>, vector<16x32xf32>,
    } else {
    }
    %c0 = arith.constant 0 : index
    %c0_1 = arith.constant 0 : index
    %3 = vector.load %arg17[%c0, %c0_1] : memref<16x32xf32, #tpu.memory_space<vmem>>, vector<16x32xf32>
    %4 = arith.truncf %3 : vector<16x32xf32> to vector<16x32xbf16>
    %c0_2 = arith.constant 0 : index
    %c0_3 = arith.constant 0 : index
    %c0_4 = arith.constant 0 : index
    %5 = vector.load %arg4[%c0_2, %c0_3, %c0_4] : memref<1x32x96xbf16, #tpu.memory_space<vmem>>, vector<1x32x96xbf16>
    %6 = vector.shape_cast %5 : vector<1x32x96xbf16> to vector<32x96xbf16>
    %cst = arith.constant dense<0.000000e+00> : vector<16x96xf32>
    %7 = tpu.matmul %4, %6, %cst {dimension_numbers = #tpu.dot_dimension_numbers<[1], [0], [0], [1], [0, 0, 1, 1], [], []>} : vector<16x32xbf16>, vector<32x96xbf16>, vector<16x96xf32> -> vector<16x96xf32>
    %c0_5 = arith.constant 0 : index
    %c0_6 = arith.constant 0 : index
    %c0_7 = arith.constant 0 : index
    %8 = vector.load %arg5[%c0_5, %c0_6, %c0_7] : memref<1x1x96xf32, #tpu.memory_space<vmem>>, vector<1x1x96xf32>
    %9 = vector.shape_cast %8 : vector<1x1x96xf32> to vector<1x96xf32>
    %10 = vector.broadcast %9 : vector<1x96xf32> to vector<16x96xf32>
    %11 = arith.addf %7, %10 : vector<16x96xf32>
    %12 = vector.extract_strided_slice %11 {offsets = [0, 0], sizes = [16, 32], strides = [1, 1]} : vector<16x96xf32> to vector<16x32xf32>
    %13 = vector.shape_cast %12 : vector<16x32xf32> to vector<2x8x32xf32>
    %14 = vector.extract_strided_slice %11 {offsets = [0, 32], sizes = [16, 32], strides = [1, 1]} : vector<16x96xf32> to vector<16x32xf32>
    %15 = vector.shape_cast %14 : vector<16x32xf32> to vector<2x8x32xf32>
    %16 = vector.extract_strided_slice %11 {offsets = [0, 64], sizes = [16, 32], strides = [1, 1]} : vector<16x96xf32> to vector<16x32xf32>
    %17 = vector.shape_cast %16 : vector<16x32xf32> to vector<2x8x32xf32>
    %c0_8 = arith.constant 0 : index
    %c0_9 = arith.constant 0 : index
    %18 = vector.load %arg3[%c0_8, %c0_9] : memref<8x8xf32, #tpu.memory_space<vmem>>, vector<8x8xf32>
    %19 = vector.shape_cast %18 : vector<8x8xf32> to vector<1x8x8xf32>
    %20 = vector.extract_strided_slice %13 {offsets = [0, 0, 0], sizes = [2, 8, 8], strides = [1, 1, 1]} : vector<2x8x32xf32> to vector<2x8x8xf32>
    %21 = arith.truncf %20 : vector<2x8x8xf32> to vector<2x8x8xbf16>
    %22 = vector.extract_strided_slice %15 {offsets = [0, 0, 0], sizes = [2, 8, 8], strides = [1, 1, 1]} : vector<2x8x32xf32> to vector<2x8x8xf32>
    %23 = arith.truncf %22 : vector<2x8x8xf32> to vector<2x8x8xbf16>
    %24 = vector.extract_strided_slice %17 {offsets = [0, 0, 0], sizes = [2, 8, 8], strides = [1, 1, 1]} : vector<2x8x32xf32> to vector<2x8x8xf32>
    %25 = arith.truncf %24 : vector<2x8x8xf32> to vector<2x8x8xbf16>
    "tpu.trace_start"() <{level = 10 : i32, message = "bqd,bkd->bqk"}> : () -> ()
    %cst_10 = arith.constant dense<0.000000e+00> : vector<2x8x8xf32>
    %26 = tpu.matmul %21, %23, %cst_10 {dimension_numbers = #tpu.dot_dimension_numbers<[2], [2], [1], [1], [0, 0, 0, 1, 1, 1], [0], [0]>} : vector<2x8x8xbf16>, vector<2x8x8xbf16>, vector<2x8x8xf32> -> vector<2x8x8xf32>
    "tpu.trace_stop"() : () -> ()
    %cst_11 = arith.constant 0.353553385 : f32
    %27 = vector.broadcast %cst_11 : f32 to vector<2x8x8xf32>
    %28 = arith.mulf %26, %27 : vector<2x8x8xf32>
    %29 = vector.broadcast %19 : vector<1x8x8xf32> to vector<2x8x8xf32>
    %30 = arith.addf %28, %29 : vector<2x8x8xf32>
    %cst_12 = arith.constant dense<0xFF800000> : vector<2x8xf32>
    %31 = vector.multi_reduction <maximumf>, %30, %cst_12 [2] : vector<2x8x8xf32> to vector<2x8xf32>
    %32 = vector.shape_cast %31 : vector<2x8xf32> to vector<2x8x1xf32>
    %33 = vector.broadcast %32 : vector<2x8x1xf32> to vector<2x8x8xf32>
    %34 = arith.subf %30, %33 : vector<2x8x8xf32>
    %35 = math.exp %34 : vector<2x8x8xf32>
    %cst_13 = arith.constant dense<0.000000e+00> : vector<2x8xf32>
    %36 = vector.multi_reduction <add>, %35, %cst_13 [2] : vector<2x8x8xf32> to vector<2x8xf32>
    %37 = vector.shape_cast %36 : vector<2x8xf32> to vector<2x8x1xf32>
    %38 = tpu.reciprocal %37 {approx = true} : vector<2x8x1xf32> -> vector<2x8x1xf32>
    %39 = vector.broadcast %38 : vector<2x8x1xf32> to vector<2x8x8xf32>
    %40 = arith.mulf %35, %39 : vector<2x8x8xf32>
    %41 = arith.truncf %40 : vector<2x8x8xf32> to vector<2x8x8xbf16>
    "tpu.trace_start"() <{level = 10 : i32, message = "bqk,bkd->bqd"}> : () -> ()
    %cst_14 = arith.constant dense<0.000000e+00> : vector<2x8x8xf32>
    %42 = tpu.matmul %41, %25, %cst_14 {dimension_numbers = #tpu.dot_dimension_numbers<[2], [1], [1], [2], [0, 0, 0, 1, 1, 2], [0], [0]>} : vector<2x8x8xbf16>, vector<2x8x8xbf16>, vector<2x8x8xf32> -> vector<2x8x8xf32>
    "tpu.trace_stop"() : () -> ()
    %43 = vector.shape_cast %42 : vector<2x8x8xf32> to vector<16x8xf32>
    %c0_15 = arith.constant 0 : index
    %c0_16 = arith.constant 0 : index
    %44 = vector.load %arg18[%c0_15, %c0_16] : memref<16x32xf32, #tpu.memory_space<vmem>>, vector<16x8xf32>
    tpu.vector_store %arg18[%c0_15, %c0_16], %43 {strides = array<i32>} : memref<16x32xf32, #tpu.memory_space<vmem>>, vector<16x8xf32>,
    %45 = vector.extract_strided_slice %13 {offsets = [0, 0, 8], sizes = [2, 8, 8], strides = [1, 1, 1]} : vector<2x8x32xf32> to vector<2x8x8xf32>
    %46 = arith.truncf %45 : vector<2x8x8xf32> to vector<2x8x8xbf16>
    %47 = vector.extract_strided_slice %15 {offsets = [0, 0, 8], sizes = [2, 8, 8], strides = [1, 1, 1]} : vector<2x8x32xf32> to vector<2x8x8xf32>
    %48 = arith.truncf %47 : vector<2x8x8xf32> to vector<2x8x8xbf16>
    %49 = vector.extract_strided_slice %17 {offsets = [0, 0, 8], sizes = [2, 8, 8], strides = [1, 1, 1]} : vector<2x8x32xf32> to vector<2x8x8xf32>
    %50 = arith.truncf %49 : vector<2x8x8xf32> to vector<2x8x8xbf16>
    "tpu.trace_start"() <{level = 10 : i32, message = "bqd,bkd->bqk"}> : () -> ()
    %cst_17 = arith.constant dense<0.000000e+00> : vector<2x8x8xf32>
    %51 = tpu.matmul %46, %48, %cst_17 {dimension_numbers = #tpu.dot_dimension_numbers<[2], [2], [1], [1], [0, 0, 0, 1, 1, 1], [0], [0]>} : vector<2x8x8xbf16>, vector<2x8x8xbf16>, vector<2x8x8xf32> -> vector<2x8x8xf32>
    "tpu.trace_stop"() : () -> ()
    %cst_18 = arith.constant 0.353553385 : f32
    %52 = vector.broadcast %cst_18 : f32 to vector<2x8x8xf32>
    %53 = arith.mulf %51, %52 : vector<2x8x8xf32>
    %54 = vector.broadcast %19 : vector<1x8x8xf32> to vector<2x8x8xf32>
    %55 = arith.addf %53, %54 : vector<2x8x8xf32>
    %cst_19 = arith.constant dense<0xFF800000> : vector<2x8xf32>
    %56 = vector.multi_reduction <maximumf>, %55, %cst_19 [2] : vector<2x8x8xf32> to vector<2x8xf32>
    %57 = vector.shape_cast %56 : vector<2x8xf32> to vector<2x8x1xf32>
    %58 = vector.broadcast %57 : vector<2x8x1xf32> to vector<2x8x8xf32>
    %59 = arith.subf %55, %58 : vector<2x8x8xf32>
    %60 = math.exp %59 : vector<2x8x8xf32>
    %cst_20 = arith.constant dense<0.000000e+00> : vector<2x8xf32>
    %61 = vector.multi_reduction <add>, %60, %cst_20 [2] : vector<2x8x8xf32> to vector<2x8xf32>
    %62 = vector.shape_cast %61 : vector<2x8xf32> to vector<2x8x1xf32>
    %63 = tpu.reciprocal %62 {approx = true} : vector<2x8x1xf32> -> vector<2x8x1xf32>
    %64 = vector.broadcast %63 : vector<2x8x1xf32> to vector<2x8x8xf32>
    %65 = arith.mulf %60, %64 : vector<2x8x8xf32>
    %66 = arith.truncf %65 : vector<2x8x8xf32> to vector<2x8x8xbf16>
    "tpu.trace_start"() <{level = 10 : i32, message = "bqk,bkd->bqd"}> : () -> ()
    %cst_21 = arith.constant dense<0.000000e+00> : vector<2x8x8xf32>
    %67 = tpu.matmul %66, %50, %cst_21 {dimension_numbers = #tpu.dot_dimension_numbers<[2], [1], [1], [2], [0, 0, 0, 1, 1, 2], [0], [0]>} : vector<2x8x8xbf16>, vector<2x8x8xbf16>, vector<2x8x8xf32> -> vector<2x8x8xf32>
    "tpu.trace_stop"() : () -> ()
    %68 = vector.shape_cast %67 : vector<2x8x8xf32> to vector<16x8xf32>
    %c0_22 = arith.constant 0 : index
    %c8 = arith.constant 8 : index
    %69 = vector.load %arg18[%c0_22, %c8] : memref<16x32xf32, #tpu.memory_space<vmem>>, vector<16x8xf32>
    tpu.vector_store %arg18[%c0_22, %c8], %68 {strides = array<i32>} : memref<16x32xf32, #tpu.memory_space<vmem>>, vector<16x8xf32>,
    %70 = vector.extract_strided_slice %13 {offsets = [0, 0, 16], sizes = [2, 8, 8], strides = [1, 1, 1]} : vector<2x8x32xf32> to vector<2x8x8xf32>
    %71 = arith.truncf %70 : vector<2x8x8xf32> to vector<2x8x8xbf16>
    %72 = vector.extract_strided_slice %15 {offsets = [0, 0, 16], sizes = [2, 8, 8], strides = [1, 1, 1]} : vector<2x8x32xf32> to vector<2x8x8xf32>
    %73 = arith.truncf %72 : vector<2x8x8xf32> to vector<2x8x8xbf16>
    %74 = vector.extract_strided_slice %17 {offsets = [0, 0, 16], sizes = [2, 8, 8], strides = [1, 1, 1]} : vector<2x8x32xf32> to vector<2x8x8xf32>
    %75 = arith.truncf %74 : vector<2x8x8xf32> to vector<2x8x8xbf16>
    "tpu.trace_start"() <{level = 10 : i32, message = "bqd,bkd->bqk"}> : () -> ()
    %cst_23 = arith.constant dense<0.000000e+00> : vector<2x8x8xf32>
    %76 = tpu.matmul %71, %73, %cst_23 {dimension_numbers = #tpu.dot_dimension_numbers<[2], [2], [1], [1], [0, 0, 0, 1, 1, 1], [0], [0]>} : vector<2x8x8xbf16>, vector<2x8x8xbf16>, vector<2x8x8xf32> -> vector<2x8x8xf32>
    "tpu.trace_stop"() : () -> ()
    %cst_24 = arith.constant 0.353553385 : f32
    %77 = vector.broadcast %cst_24 : f32 to vector<2x8x8xf32>
    %78 = arith.mulf %76, %77 : vector<2x8x8xf32>
    %79 = vector.broadcast %19 : vector<1x8x8xf32> to vector<2x8x8xf32>
    %80 = arith.addf %78, %79 : vector<2x8x8xf32>
    %cst_25 = arith.constant dense<0xFF800000> : vector<2x8xf32>
    %81 = vector.multi_reduction <maximumf>, %80, %cst_25 [2] : vector<2x8x8xf32> to vector<2x8xf32>
    %82 = vector.shape_cast %81 : vector<2x8xf32> to vector<2x8x1xf32>
    %83 = vector.broadcast %82 : vector<2x8x1xf32> to vector<2x8x8xf32>
    %84 = arith.subf %80, %83 : vector<2x8x8xf32>
    %85 = math.exp %84 : vector<2x8x8xf32>
    %cst_26 = arith.constant dense<0.000000e+00> : vector<2x8xf32>
    %86 = vector.multi_reduction <add>, %85, %cst_26 [2] : vector<2x8x8xf32> to vector<2x8xf32>
    %87 = vector.shape_cast %86 : vector<2x8xf32> to vector<2x8x1xf32>
    %88 = tpu.reciprocal %87 {approx = true} : vector<2x8x1xf32> -> vector<2x8x1xf32>
    %89 = vector.broadcast %88 : vector<2x8x1xf32> to vector<2x8x8xf32>
    %90 = arith.mulf %85, %89 : vector<2x8x8xf32>
    %91 = arith.truncf %90 : vector<2x8x8xf32> to vector<2x8x8xbf16>
    "tpu.trace_start"() <{level = 10 : i32, message = "bqk,bkd->bqd"}> : () -> ()
    %cst_27 = arith.constant dense<0.000000e+00> : vector<2x8x8xf32>
    %92 = tpu.matmul %91, %75, %cst_27 {dimension_numbers = #tpu.dot_dimension_numbers<[2], [1], [1], [2], [0, 0, 0, 1, 1, 2], [0], [0]>} : vector<2x8x8xbf16>, vector<2x8x8xbf16>, vector<2x8x8xf32> -> vector<2x8x8xf32>
    "tpu.trace_stop"() : () -> ()
    %93 = vector.shape_cast %92 : vector<2x8x8xf32> to vector<16x8xf32>
    %c0_28 = arith.constant 0 : index
    %c16 = arith.constant 16 : index
    %94 = vector.load %arg18[%c0_28, %c16] : memref<16x32xf32, #tpu.memory_space<vmem>>, vector<16x8xf32>
    tpu.vector_store %arg18[%c0_28, %c16], %93 {strides = array<i32>} : memref<16x32xf32, #tpu.memory_space<vmem>>, vector<16x8xf32>,
    %95 = vector.extract_strided_slice %13 {offsets = [0, 0, 24], sizes = [2, 8, 8], strides = [1, 1, 1]} : vector<2x8x32xf32> to vector<2x8x8xf32>
    %96 = arith.truncf %95 : vector<2x8x8xf32> to vector<2x8x8xbf16>
    %97 = vector.extract_strided_slice %15 {offsets = [0, 0, 24], sizes = [2, 8, 8], strides = [1, 1, 1]} : vector<2x8x32xf32> to vector<2x8x8xf32>
    %98 = arith.truncf %97 : vector<2x8x8xf32> to vector<2x8x8xbf16>
    %99 = vector.extract_strided_slice %17 {offsets = [0, 0, 24], sizes = [2, 8, 8], strides = [1, 1, 1]} : vector<2x8x32xf32> to vector<2x8x8xf32>
    %100 = arith.truncf %99 : vector<2x8x8xf32> to vector<2x8x8xbf16>
    "tpu.trace_start"() <{level = 10 : i32, message = "bqd,bkd->bqk"}> : () -> ()
    %cst_29 = arith.constant dense<0.000000e+00> : vector<2x8x8xf32>
    %101 = tpu.matmul %96, %98, %cst_29 {dimension_numbers = #tpu.dot_dimension_numbers<[2], [2], [1], [1], [0, 0, 0, 1, 1, 1], [0], [0]>} : vector<2x8x8xbf16>, vector<2x8x8xbf16>, vector<2x8x8xf32> -> vector<2x8x8xf32>
    "tpu.trace_stop"() : () -> ()
    %cst_30 = arith.constant 0.353553385 : f32
    %102 = vector.broadcast %cst_30 : f32 to vector<2x8x8xf32>
    %103 = arith.mulf %101, %102 : vector<2x8x8xf32>
    %104 = vector.broadcast %19 : vector<1x8x8xf32> to vector<2x8x8xf32>
    %105 = arith.addf %103, %104 : vector<2x8x8xf32>
    %cst_31 = arith.constant dense<0xFF800000> : vector<2x8xf32>
    %106 = vector.multi_reduction <maximumf>, %105, %cst_31 [2] : vector<2x8x8xf32> to vector<2x8xf32>
    %107 = vector.shape_cast %106 : vector<2x8xf32> to vector<2x8x1xf32>
    %108 = vector.broadcast %107 : vector<2x8x1xf32> to vector<2x8x8xf32>
    %109 = arith.subf %105, %108 : vector<2x8x8xf32>
    %110 = math.exp %109 : vector<2x8x8xf32>
    %cst_32 = arith.constant dense<0.000000e+00> : vector<2x8xf32>
    %111 = vector.multi_reduction <add>, %110, %cst_32 [2] : vector<2x8x8xf32> to vector<2x8xf32>
    %112 = vector.shape_cast %111 : vector<2x8xf32> to vector<2x8x1xf32>
    %113 = tpu.reciprocal %112 {approx = true} : vector<2x8x1xf32> -> vector<2x8x1xf32>
    %114 = vector.broadcast %113 : vector<2x8x1xf32> to vector<2x8x8xf32>
    %115 = arith.mulf %110, %114 : vector<2x8x8xf32>
    %116 = arith.truncf %115 : vector<2x8x8xf32> to vector<2x8x8xbf16>
    "tpu.trace_start"() <{level = 10 : i32, message = "bqk,bkd->bqd"}> : () -> ()
    %cst_33 = arith.constant dense<0.000000e+00> : vector<2x8x8xf32>
    %117 = tpu.matmul %116, %100, %cst_33 {dimension_numbers = #tpu.dot_dimension_numbers<[2], [1], [1], [2], [0, 0, 0, 1, 1, 2], [0], [0]>} : vector<2x8x8xbf16>, vector<2x8x8xbf16>, vector<2x8x8xf32> -> vector<2x8x8xf32>
    "tpu.trace_stop"() : () -> ()
    %118 = vector.shape_cast %117 : vector<2x8x8xf32> to vector<16x8xf32>
    %c0_34 = arith.constant 0 : index
    %c24 = arith.constant 24 : index
    %119 = vector.load %arg18[%c0_34, %c24] : memref<16x32xf32, #tpu.memory_space<vmem>>, vector<16x8xf32>
    tpu.vector_store %arg18[%c0_34, %c24], %118 {strides = array<i32>} : memref<16x32xf32, #tpu.memory_space<vmem>>, vector<16x8xf32>,
    %c0_35 = arith.constant 0 : index
    %c0_36 = arith.constant 0 : index
    %120 = vector.load %arg18[%c0_35, %c0_36] : memref<16x32xf32, #tpu.memory_space<vmem>>, vector<16x32xf32>
    %121 = arith.truncf %120 : vector<16x32xf32> to vector<16x32xbf16>
    %c0_37 = arith.constant 0 : index
    %c0_38 = arith.constant 0 : index
    %c0_39 = arith.constant 0 : index
    %122 = vector.load %arg6[%c0_37, %c0_38, %c0_39] : memref<1x32x32xbf16, #tpu.memory_space<vmem>>, vector<1x32x32xbf16>
    %123 = vector.shape_cast %122 : vector<1x32x32xbf16> to vector<32x32xbf16>
    %cst_40 = arith.constant dense<0.000000e+00> : vector<16x32xf32>
    %124 = tpu.matmul %121, %123, %cst_40 {dimension_numbers = #tpu.dot_dimension_numbers<[1], [0], [0], [1], [0, 0, 1, 1], [], []>} : vector<16x32xbf16>, vector<32x32xbf16>, vector<16x32xf32> -> vector<16x32xf32>
    %c0_41 = arith.constant 0 : index
    %c0_42 = arith.constant 0 : index
    %c0_43 = arith.constant 0 : index
    %125 = vector.load %arg7[%c0_41, %c0_42, %c0_43] : memref<1x1x32xf32, #tpu.memory_space<vmem>>, vector<1x1x32xf32>
    %126 = vector.shape_cast %125 : vector<1x1x32xf32> to vector<1x32xf32>
    %127 = vector.broadcast %126 : vector<1x32xf32> to vector<16x32xf32>
    %128 = arith.addf %124, %127 : vector<16x32xf32>
    %129 = arith.addf %3, %128 : vector<16x32xf32>
    %c0_44 = arith.constant 0 : index
    %c0_45 = arith.constant 0 : index
    %c0_46 = arith.constant 0 : index
    %130 = vector.load %arg12[%c0_44, %c0_45, %c0_46] : memref<1x1x32xf32, #tpu.memory_space<vmem>>, vector<1x1x32xf32>
    %131 = vector.shape_cast %130 : vector<1x1x32xf32> to vector<1x32xf32>
    %c0_47 = arith.constant 0 : index
    %c0_48 = arith.constant 0 : index
    %c0_49 = arith.constant 0 : index
    %132 = vector.load %arg13[%c0_47, %c0_48, %c0_49] : memref<1x1x32xf32, #tpu.memory_space<vmem>>, vector<1x1x32xf32>
    %133 = vector.shape_cast %132 : vector<1x1x32xf32> to vector<1x32xf32>
    %cst_50 = arith.constant dense<0.000000e+00> : vector<16xf32>
    %134 = vector.multi_reduction <add>, %129, %cst_50 [1] : vector<16x32xf32> to vector<16xf32>
    %135 = vector.shape_cast %134 : vector<16xf32> to vector<16x1xf32>
    %cst_51 = arith.constant 3.200000e+01 : f32
    %136 = vector.broadcast %cst_51 : f32 to vector<16x1xf32>
    %137 = arith.divf %135, %136 : vector<16x1xf32>
    %138 = vector.broadcast %137 : vector<16x1xf32> to vector<16x32xf32>
    %139 = arith.subf %129, %138 : vector<16x32xf32>
    %140 = arith.mulf %139, %139 : vector<16x32xf32>
    %cst_52 = arith.constant dense<0.000000e+00> : vector<16xf32>
    %141 = vector.multi_reduction <add>, %140, %cst_52 [1] : vector<16x32xf32> to vector<16xf32>
    %142 = vector.shape_cast %141 : vector<16xf32> to vector<16x1xf32>
    %cst_53 = arith.constant 3.200000e+01 : f32
    %143 = vector.broadcast %cst_53 : f32 to vector<16x1xf32>
    %144 = arith.divf %142, %143 : vector<16x1xf32>
    %145 = vector.broadcast %137 : vector<16x1xf32> to vector<16x32xf32>
    %146 = arith.subf %129, %145 : vector<16x32xf32>
    %cst_54 = arith.constant 9.99999974E-6 : f32
    %147 = vector.broadcast %cst_54 : f32 to vector<16x1xf32>
    %148 = arith.addf %144, %147 : vector<16x1xf32>
    %149 = math.rsqrt %148 : vector<16x1xf32>
    %150 = vector.broadcast %149 : vector<16x1xf32> to vector<16x32xf32>
    %151 = arith.mulf %146, %150 : vector<16x32xf32>
    %152 = vector.broadcast %131 : vector<1x32xf32> to vector<16x32xf32>
    %153 = arith.mulf %151, %152 : vector<16x32xf32>
    %154 = vector.broadcast %133 : vector<1x32xf32> to vector<16x32xf32>
    %155 = arith.addf %153, %154 : vector<16x32xf32>
    %156 = arith.truncf %155 : vector<16x32xf32> to vector<16x32xbf16>
    %c0_55 = arith.constant 0 : index
    %c0_56 = arith.constant 0 : index
    %c0_57 = arith.constant 0 : index
    %157 = vector.load %arg8[%c0_55, %c0_56, %c0_57] : memref<1x32x64xbf16, #tpu.memory_space<vmem>>, vector<1x32x64xbf16>
    %158 = vector.shape_cast %157 : vector<1x32x64xbf16> to vector<32x64xbf16>
    %cst_58 = arith.constant dense<0.000000e+00> : vector<16x64xf32>
    %159 = tpu.matmul %156, %158, %cst_58 {dimension_numbers = #tpu.dot_dimension_numbers<[1], [0], [0], [1], [0, 0, 1, 1], [], []>} : vector<16x32xbf16>, vector<32x64xbf16>, vector<16x64xf32> -> vector<16x64xf32>
    %c0_59 = arith.constant 0 : index
    %c0_60 = arith.constant 0 : index
    %c0_61 = arith.constant 0 : index
    %160 = vector.load %arg9[%c0_59, %c0_60, %c0_61] : memref<1x1x64xf32, #tpu.memory_space<vmem>>, vector<1x1x64xf32>
    %161 = vector.shape_cast %160 : vector<1x1x64xf32> to vector<1x64xf32>
    %162 = vector.broadcast %161 : vector<1x64xf32> to vector<16x64xf32>
    %163 = arith.addf %159, %162 : vector<16x64xf32>
    %cst_62 = arith.constant 0.000000e+00 : f32
    %164 = vector.broadcast %cst_62 : f32 to vector<16x64xf32>
    %165 = arith.maximumf %163, %164 : vector<16x64xf32>
    %166 = arith.truncf %165 : vector<16x64xf32> to vector<16x64xbf16>
    %c0_63 = arith.constant 0 : index
    %c0_64 = arith.constant 0 : index
    %c0_65 = arith.constant 0 : index
    %167 = vector.load %arg10[%c0_63, %c0_64, %c0_65] : memref<1x64x32xbf16, #tpu.memory_space<vmem>>, vector<1x64x32xbf16>
    %168 = vector.shape_cast %167 : vector<1x64x32xbf16> to vector<64x32xbf16>
    %cst_66 = arith.constant dense<0.000000e+00> : vector<16x32xf32>
    %169 = tpu.matmul %166, %168, %cst_66 {dimension_numbers = #tpu.dot_dimension_numbers<[1], [0], [0], [1], [0, 0, 1, 1], [], []>} : vector<16x64xbf16>, vector<64x32xbf16>, vector<16x32xf32> -> vector<16x32xf32>
    %c0_67 = arith.constant 0 : index
    %c0_68 = arith.constant 0 : index
    %c0_69 = arith.constant 0 : index
    %170 = vector.load %arg11[%c0_67, %c0_68, %c0_69] : memref<1x1x32xf32, #tpu.memory_space<vmem>>, vector<1x1x32xf32>
    %171 = vector.shape_cast %170 : vector<1x1x32xf32> to vector<1x32xf32>
    %172 = vector.broadcast %171 : vector<1x32xf32> to vector<16x32xf32>
    %173 = arith.addf %169, %172 : vector<16x32xf32>
    %174 = arith.addf %155, %173 : vector<16x32xf32>
    %c0_70 = arith.constant 0 : index
    %c0_71 = arith.constant 0 : index
    %c0_72 = arith.constant 0 : index
    %175 = vector.load %arg14[%c0_70, %c0_71, %c0_72] : memref<1x1x32xf32, #tpu.memory_space<vmem>>, vector<1x1x32xf32>
    %176 = vector.shape_cast %175 : vector<1x1x32xf32> to vector<1x32xf32>
    %c0_73 = arith.constant 0 : index
    %c0_74 = arith.constant 0 : index
    %c0_75 = arith.constant 0 : index
    %177 = vector.load %arg15[%c0_73, %c0_74, %c0_75] : memref<1x1x32xf32, #tpu.memory_space<vmem>>, vector<1x1x32xf32>
    %178 = vector.shape_cast %177 : vector<1x1x32xf32> to vector<1x32xf32>
    %cst_76 = arith.constant dense<0.000000e+00> : vector<16xf32>
    %179 = vector.multi_reduction <add>, %174, %cst_76 [1] : vector<16x32xf32> to vector<16xf32>
    %180 = vector.shape_cast %179 : vector<16xf32> to vector<16x1xf32>
    %cst_77 = arith.constant 3.200000e+01 : f32
    %181 = vector.broadcast %cst_77 : f32 to vector<16x1xf32>
    %182 = arith.divf %180, %181 : vector<16x1xf32>
    %183 = vector.broadcast %182 : vector<16x1xf32> to vector<16x32xf32>
    %184 = arith.subf %174, %183 : vector<16x32xf32>
    %185 = arith.mulf %184, %184 : vector<16x32xf32>
    %cst_78 = arith.constant dense<0.000000e+00> : vector<16xf32>
    %186 = vector.multi_reduction <add>, %185, %cst_78 [1] : vector<16x32xf32> to vector<16xf32>
    %187 = vector.shape_cast %186 : vector<16xf32> to vector<16x1xf32>
    %cst_79 = arith.constant 3.200000e+01 : f32
    %188 = vector.broadcast %cst_79 : f32 to vector<16x1xf32>
    %189 = arith.divf %187, %188 : vector<16x1xf32>
    %190 = vector.broadcast %182 : vector<16x1xf32> to vector<16x32xf32>
    %191 = arith.subf %174, %190 : vector<16x32xf32>
    %cst_80 = arith.constant 9.99999974E-6 : f32
    %192 = vector.broadcast %cst_80 : f32 to vector<16x1xf32>
    %193 = arith.addf %189, %192 : vector<16x1xf32>
    %194 = math.rsqrt %193 : vector<16x1xf32>
    %195 = vector.broadcast %194 : vector<16x1xf32> to vector<16x32xf32>
    %196 = arith.mulf %191, %195 : vector<16x32xf32>
    %197 = vector.broadcast %176 : vector<1x32xf32> to vector<16x32xf32>
    %198 = arith.mulf %196, %197 : vector<16x32xf32>
    %199 = vector.broadcast %178 : vector<1x32xf32> to vector<16x32xf32>
    %200 = arith.addf %198, %199 : vector<16x32xf32>
    %c0_81 = arith.constant 0 : index
    %c0_82 = arith.constant 0 : index
    %201 = vector.load %arg17[%c0_81, %c0_82] : memref<16x32xf32, #tpu.memory_space<vmem>>, vector<16x32xf32>
    tpu.vector_store %arg17[%c0_81, %c0_82], %200 {strides = array<i32>} : memref<16x32xf32, #tpu.memory_space<vmem>>, vector<16x32xf32>,
    %c1_i32 = arith.constant 1 : i32
    %202 = arith.cmpi eq, %arg0, %c1_i32 : i32
    %203 = arith.extui %202 : i1 to i32
    %c0_i32_83 = arith.constant 0 : i32
    %204 = arith.cmpi ne, %203, %c0_i32_83 : i32
    scf.if %204 {
      %205 = vector.shape_cast %200 : vector<16x32xf32> to vector<2x8x32xf32>
      %c0_84 = arith.constant 0 : index
      %c0_85 = arith.constant 0 : index
      %c0_86 = arith.constant 0 : index
      %206 = vector.load %arg16[%c0_84, %c0_85, %c0_86] : memref<2x8x32xf32, #tpu.memory_space<vmem>>, vector<2x8x32xf32>
      tpu.vector_store %arg16[%c0_84, %c0_85, %c0_86], %205 {strides = array<i32>} : memref<2x8x32xf32, #tpu.memory_space<vmem>>, vector<2x8x32xf32>,
    } else {
    }
    return
  }
  func.func @transform_0(%arg0: i32) -> (i32, i32, i32) {
    %c0_i32 = arith.constant 0 : i32
    %c0_i32_0 = arith.constant 0 : i32
    %c0_i32_1 = arith.constant 0 : i32
    %c0_i32_2 = arith.constant 0 : i32
    return %c0_i32, %c0_i32_0, %c0_i32_1 : i32, i32, i32
  }
  func.func @transform_1(%arg0: i32) -> (i32, i32) {
    %c0_i32 = arith.constant 0 : i32
    %c0_i32_0 = arith.constant 0 : i32
    %c0_i32_1 = arith.constant 0 : i32
    return %c0_i32, %c0_i32_0 : i32, i32
  }
  func.func @transform_2(%arg0: i32) -> (i32, i32) {
    %c0_i32 = arith.constant 0 : i32
    %c0_i32_0 = arith.constant 0 : i32
    %c0_i32_1 = arith.constant 0 : i32
    return %c0_i32, %c0_i32_0 : i32, i32
  }
  func.func @transform_3(%arg0: i32) -> (i32, i32, i32) {
    %c0_i32 = arith.constant 0 : i32
    %c0_i32_0 = arith.constant 0 : i32
    %c0_i32_1 = arith.constant 0 : i32
    return %arg0, %c0_i32, %c0_i32_0 : i32, i32, i32
  }
  func.func @transform_4(%arg0: i32) -> (i32, i32, i32) {
    %c0_i32 = arith.constant 0 : i32
    %c0_i32_0 = arith.constant 0 : i32
    %c0_i32_1 = arith.constant 0 : i32
    return %arg0, %c0_i32, %c0_i32_0 : i32, i32, i32
  }
  func.func @transform_5(%arg0: i32) -> (i32, i32, i32) {
    %c0_i32 = arith.constant 0 : i32
    %c0_i32_0 = arith.constant 0 : i32
    %c0_i32_1 = arith.constant 0 : i32
    return %arg0, %c0_i32, %c0_i32_0 : i32, i32, i32
  }
  func.func @transform_6(%arg0: i32) -> (i32, i32, i32) {
    %c0_i32 = arith.constant 0 : i32
    %c0_i32_0 = arith.constant 0 : i32
    %c0_i32_1 = arith.constant 0 : i32
    return %arg0, %c0_i32, %c0_i32_0 : i32, i32, i32
  }
  func.func @transform_7(%arg0: i32) -> (i32, i32, i32) {
    %c0_i32 = arith.constant 0 : i32
    %c0_i32_0 = arith.constant 0 : i32
    %c0_i32_1 = arith.constant 0 : i32
    return %arg0, %c0_i32, %c0_i32_0 : i32, i32, i32
  }
  func.func @transform_8(%arg0: i32) -> (i32, i32, i32) {
    %c0_i32 = arith.constant 0 : i32
    %c0_i32_0 = arith.constant 0 : i32
    %c0_i32_1 = arith.constant 0 : i32
    return %arg0, %c0_i32, %c0_i32_0 : i32, i32, i32
  }
  func.func @transform_9(%arg0: i32) -> (i32, i32, i32) {
    %c0_i32 = arith.constant 0 : i32
    %c0_i32_0 = arith.constant 0 : i32
    %c0_i32_1 = arith.constant 0 : i32
    return %arg0, %c0_i32, %c0_i32_0 : i32, i32, i32
  }
  func.func @transform_10(%arg0: i32) -> (i32, i32, i32) {
    %c0_i32 = arith.constant 0 : i32
    %c0_i32_0 = arith.constant 0 : i32
    %c0_i32_1 = arith.constant 0 : i32
    return %arg0, %c0_i32, %c0_i32_0 : i32, i32, i32
  }
  func.func @transform_11(%arg0: i32) -> (i32, i32, i32) {
    %c0_i32 = arith.constant 0 : i32
    %c0_i32_0 = arith.constant 0 : i32
    %c0_i32_1 = arith.constant 0 : i32
    return %arg0, %c0_i32, %c0_i32_0 : i32, i32, i32
  }
  func.func @transform_12(%arg0: i32) -> (i32, i32, i32) {
    %c0_i32 = arith.constant 0 : i32
    %c0_i32_0 = arith.constant 0 : i32
    %c0_i32_1 = arith.constant 0 : i32
    return %arg0, %c0_i32, %c0_i32_0 : i32, i32, i32
  }
  func.func @transform_13(%arg0: i32) -> (i32, i32, i32) {
    %c0_i32 = arith.constant 0 : i32
    %c0_i32_0 = arith.constant 0 : i32
    %c0_i32_1 = arith.constant 0 : i32
    return %arg0, %c0_i32, %c0_i32_0 : i32, i32, i32
  }
  func.func @transform_14(%arg0: i32) -> (i32, i32, i32) {
    %c0_i32 = arith.constant 0 : i32
    %c0_i32_0 = arith.constant 0 : i32
    %c0_i32_1 = arith.constant 0 : i32
    return %arg0, %c0_i32, %c0_i32_0 : i32, i32, i32
  }
  func.func @transform_15(%arg0: i32) -> (i32, i32, i32) {
    %c0_i32 = arith.constant 0 : i32
    %c0_i32_0 = arith.constant 0 : i32
    %c0_i32_1 = arith.constant 0 : i32
    %c0_i32_2 = arith.constant 0 : i32
    return %c0_i32, %c0_i32_0, %c0_i32_1 : i32, i32, i32
  }
}

</mosaic_0001>

<llo_original>
// kernel: tpu_custom_call.1
$region0: #{tpu_custom_call.1}
  #allocation0 [shape = 'u32[]', space=smem, size = 0x4, offset = 0x4, fixed_abs, tag = 'smem constant byte address 0x4 - core index']
  #allocation1 [shape = 'u32[72,128]{1,0:T(1,128)}', space=vmem, size = 0x9000, scoped, tag = 'internal scratch']
  #allocation2 [shape = 'f32[16,32]{1,0:T(8,128)}', space=vmem, size = 0x2000, scoped, tag = 'scratch operand']
  #allocation3 [shape = 'f32[16,32]{1,0:T(8,128)}', space=vmem, size = 0x2000, scoped, tag = 'scratch operand']
  %s0 = inlined_call_operand.hbm [shape: f32[2,8,32], index: 0, kind: input, shape index: {}]
  %s1 = inlined_call_operand.hbm [shape: f32[8,32], index: 1, kind: input, shape index: {}]
  %s2 = inlined_call_operand.hbm [shape: f32[8,8], index: 2, kind: input, shape index: {}]
  %s3 = inlined_call_operand.vmem [shape: bf16[2,32,96], index: 3, kind: input, shape index: {}]
  %s4 = inlined_call_operand.vmem [shape: f32[2,1,96], index: 4, kind: input, shape index: {}]
  %s5 = inlined_call_operand.vmem [shape: bf16[2,32,32], index: 5, kind: input, shape index: {}]
  %s6 = inlined_call_operand.vmem [shape: f32[2,1,32], index: 6, kind: input, shape index: {}]
  %s7 = inlined_call_operand.vmem [shape: bf16[2,32,64], index: 7, kind: input, shape index: {}]
  %s8 = inlined_call_operand.vmem [shape: f32[2,1,64], index: 8, kind: input, shape index: {}]
  %s9 = inlined_call_operand.vmem [shape: bf16[2,64,32], index: 9, kind: input, shape index: {}]
  %s10 = inlined_call_operand.vmem [shape: f32[2,1,32], index: 10, kind: input, shape index: {}]
  %s11 = inlined_call_operand.hbm [shape: f32[2,1,32], index: 11, kind: input, shape index: {}]
  %s12 = inlined_call_operand.vmem [shape: f32[2,1,32], index: 12, kind: input, shape index: {}]
  %s13 = inlined_call_operand.hbm [shape: f32[2,1,32], index: 13, kind: input, shape index: {}]
  %s14 = inlined_call_operand.vmem [shape: f32[2,1,32], index: 14, kind: input, shape index: {}]
  %s15 = inlined_call_operand.hbm [shape: f32[2,8,32], index: 15, kind: output, shape index: {}]
  %s16 = sld [smem:[#allocation0]]
  $region121: #{tpu_custom_call.1} parent=0
    _
  %s18 = ssub.s32 1, %s16
  %s19 = scalar_select 0, %s18, %s16
  $region1: #{tpu_custom_call.1} parent=0
    #allocation4 [shape = 'u8[8192]{0}', space=vmem, size = 0x2000, scoped, tag = 'input window, operand 0, single buffered']
    #allocation5 [shape = 's32[2]{0}', space=sflag, size = 0x8, scoped, tag = 'scoped memory for tpu_custom_call.1']
    #allocation6 [shape = 's32[2]{0}', space=sflag, size = 0x8, scoped, tag = 'scoped memory for tpu_custom_call.1']
    #allocation7 [shape = 'u8[4096]{0}', space=vmem, size = 0x1000, scoped, tag = 'input window, operand 1, single buffered']
    #allocation8 [shape = 's32[1]{0}', space=sflag, size = 0x4, scoped, tag = 'scoped memory for tpu_custom_call.1']
    #allocation9 [shape = 'u8[4096]{0}', space=vmem, size = 0x1000, scoped, tag = 'input window, operand 2, single buffered']
    #allocation10 [shape = 'u8[1024]{0}', space=vmem, size = 0x400, scoped, tag = 'input window, operand 11']
    #allocation11 [shape = 's32[2]{0}', space=sflag, size = 0x8, scoped, tag = 'scoped memory for tpu_custom_call.1']
    #allocation12 [shape = 'u8[1024]{0}', space=vmem, size = 0x400, scoped, tag = 'input window, operand 13']
    #allocation13 [shape = 'u8[8192]{0}', space=vmem, size = 0x2000, scoped, tag = 'output window, operand 0, single buffered']
    %20 = vsyncpa [#allocation5], 0
    %21 = vsyncpa [#allocation8], 0
    %22 = vsyncpa [#allocation11], 0
    %s23 = scalar_lea.sflag [#allocation11], 1
    %24 = vsyncpa %s23, 0
    %25 = vsyncpa [#allocation6], 0
    loop: start=0, step=1, limit=4
    $region2: #{tpu_custom_call.1} parent=1 // loop_pre_header
      _
    $region3: #{tpu_custom_call.1} parent=1 // loop_header
      %s27 = sphi 0, %s31
      %p28 = scmp.ge.s32.totalorder %s27, 4
      %s35 = sphi 0, %s35
      %s37 = sphi 0, %s35
      %s38 = sphi 0, %s37
      %s52 = sphi 0, %s38
      %s56 = sphi 0, %s56
      %s58 = sphi 0, %s56
      %s59 = sphi 0, %s58
      %s73 = sphi 0, %s59
      %s77 = sphi 0, %s77
      %s79 = sphi 0, %s77
      %s80 = sphi 0, %s79
      %s94 = sphi 0, %s80
      %s100 = sphi 0, %s102
      %s103 = sphi 0, %s100
      %s104 = sphi 0, %s103
      %s120 = sphi 0, %s104
      %s126 = sphi 0, %s128
      %s129 = sphi 0, %s126
      %s130 = sphi 0, %s129
      %s146 = sphi 0, %s130
      %s152 = sphi 0, %s154
      %s155 = sphi 0, %s152
      %s156 = sphi 0, %s155
      %s172 = sphi 0, %s156
      %s178 = sphi 0, %s180
      %s181 = sphi 0, %s178
      %s182 = sphi 0, %s181
      %s198 = sphi 0, %s182
      %s204 = sphi 0, %s206
      %s207 = sphi 0, %s204
      %s208 = sphi 0, %s207
      %s224 = sphi 0, %s208
      %s230 = sphi 0, %s232
      %s233 = sphi 0, %s230
      %s234 = sphi 0, %s233
      %s250 = sphi 0, %s234
      %s256 = sphi 0, %s258
      %s259 = sphi 0, %s256
      %s260 = sphi 0, %s259
      %s276 = sphi 0, %s260
      %s282 = sphi 0, %s284
      %s285 = sphi 0, %s282
      %s286 = sphi 0, %s285
      %s302 = sphi 0, %s286
      %s308 = sphi 0, %s310
      %s311 = sphi 0, %s308
      %s312 = sphi 0, %s311
      %s328 = sphi 0, %s312
      %s334 = sphi 0, %s336
      %s337 = sphi 0, %s334
      %s338 = sphi 0, %s337
      %s354 = sphi 0, %s338
      %s360 = sphi 0, %s362
      %s363 = sphi 0, %s360
      %s364 = sphi 0, %s363
      %s380 = sphi 0, %s364
      %s386 = sphi 0, %s388
      %s389 = sphi 0, %s386
      %s390 = sphi 0, %s389
      %s406 = sphi 0, %s390
      %s410 = sphi 0, %s410
      %s412 = sphi 0, %s410
      %s413 = sphi 0, %s412
      %s427 = sphi 0, %s413
    $region4: #{tpu_custom_call.1} parent=1 // loop_header_branch
      %30 = sbr.rel (%p28) target = $region8
    $region5: #{tpu_custom_call.1} parent=1 // loop_body
      %s32 = ssub.s32 %s27, 1
      %s33 = ssub.s32 %s27, 2
      %s34 = sadd.s32 %s27, 1
      %s36 = sadd.s32 %s35, 1
      %p39 = scmp.eq.s32.totalorder %s27, 1
      %p40 = scmp.ne.s32.totalorder %s35, %s37
      %p41 = scmp.eq.s32.totalorder %s27, 0
      %p42 = por %p40, %p41
      %p43 = scmp.ne.s32.totalorder %s35, %s37
      %p44 = scmp.eq.s32.totalorder %s32, 1
      %p45 = por %p43, %p44
      %p46 = scmp.ne.s32.totalorder %s37, %s38
      %p47 = scmp.eq.s32.totalorder %s32, 0
      %p48 = por %p46, %p47
      %p49 = scmp.ne.s32.totalorder %s37, %s38
      %p50 = scmp.eq.s32.totalorder %s33, 1
      %p51 = por %p49, %p50
      %p53 = scmp.ne.s32.totalorder %s38, %s52
      %p54 = scmp.eq.s32.totalorder %s33, 0
      %p55 = por %p53, %p54
      %s57 = sadd.s32 %s56, 1
      %p60 = scmp.eq.s32.totalorder %s27, 1
      %p61 = scmp.ne.s32.totalorder %s56, %s58
      %p62 = scmp.eq.s32.totalorder %s27, 0
      %p63 = por %p61, %p62
      %p64 = scmp.ne.s32.totalorder %s56, %s58
      %p65 = scmp.eq.s32.totalorder %s32, 1
      %p66 = por %p64, %p65
      %p67 = scmp.ne.s32.totalorder %s58, %s59
      %p68 = scmp.eq.s32.totalorder %s32, 0
      %p69 = por %p67, %p68
      %p70 = scmp.ne.s32.totalorder %s58, %s59
      %p71 = scmp.eq.s32.totalorder %s33, 1
      %p72 = por %p70, %p71
      %p74 = scmp.ne.s32.totalorder %s59, %s73
      %p75 = scmp.eq.s32.totalorder %s33, 0
      %p76 = por %p74, %p75
      %s78 = sadd.s32 %s77, 1
      %p81 = scmp.eq.s32.totalorder %s27, 1
      %p82 = scmp.ne.s32.totalorder %s77, %s79
      %p83 = scmp.eq.s32.totalorder %s27, 0
      %p84 = por %p82, %p83
      %p85 = scmp.ne.s32.totalorder %s77, %s79
      %p86 = scmp.eq.s32.totalorder %s32, 1
      %p87 = por %p85, %p86
      %p88 = scmp.ne.s32.totalorder %s79, %s80
      %p89 = scmp.eq.s32.totalorder %s32, 0
      %p90 = por %p88, %p89
      %p91 = scmp.ne.s32.totalorder %s79, %s80
      %p92 = scmp.eq.s32.totalorder %s33, 1
      %p93 = por %p91, %p92
      %p95 = scmp.ne.s32.totalorder %s80, %s94
      %p96 = scmp.eq.s32.totalorder %s33, 0
      %p97 = por %p95, %p96
      %s98 = ssub.s32 %s27, %s34
      %p99 = scmp.eq.s32.totalorder %s98, 0
      %s101 = sadd.s32 %s100, 1
      %s102 = scalar_select %p99, %s100, %s101
      %p105 = pneg %p99
      %p106 = scmp.eq.s32.totalorder %s27, 1
      %p107 = por %p105, %p106
      %p108 = scmp.ne.s32.totalorder %s100, %s103
      %p109 = scmp.eq.s32.totalorder %s27, 0
      %p110 = por %p108, %p109
      %p111 = scmp.ne.s32.totalorder %s100, %s103
      %p112 = scmp.eq.s32.totalorder %s32, 1
      %p113 = por %p111, %p112
      %p114 = scmp.ne.s32.totalorder %s103, %s104
      %p115 = scmp.eq.s32.totalorder %s32, 0
      %p116 = por %p114, %p115
      %p117 = scmp.ne.s32.totalorder %s103, %s104
      %p118 = scmp.eq.s32.totalorder %s33, 1
      %p119 = por %p117, %p118
      %p121 = scmp.ne.s32.totalorder %s104, %s120
      %p122 = scmp.eq.s32.totalorder %s33, 0
      %p123 = por %p121, %p122
      %s124 = ssub.s32 %s27, %s34
      %p125 = scmp.eq.s32.totalorder %s124, 0
      %s127 = sadd.s32 %s126, 1
      %s128 = scalar_select %p125, %s126, %s127
      %p131 = pneg %p125
      %p132 = scmp.eq.s32.totalorder %s27, 1
      %p133 = por %p131, %p132
      %p134 = scmp.ne.s32.totalorder %s126, %s129
      %p135 = scmp.eq.s32.totalorder %s27, 0
      %p136 = por %p134, %p135
      %p137 = scmp.ne.s32.totalorder %s126, %s129
      %p138 = scmp.eq.s32.totalorder %s32, 1
      %p139 = por %p137, %p138
      %p140 = scmp.ne.s32.totalorder %s129, %s130
      %p141 = scmp.eq.s32.totalorder %s32, 0
      %p142 = por %p140, %p141
      %p143 = scmp.ne.s32.totalorder %s129, %s130
      %p144 = scmp.eq.s32.totalorder %s33, 1
      %p145 = por %p143, %p144
      %p147 = scmp.ne.s32.totalorder %s130, %s146
      %p148 = scmp.eq.s32.totalorder %s33, 0
      %p149 = por %p147, %p148
      %s150 = ssub.s32 %s27, %s34
      %p151 = scmp.eq.s32.totalorder %s150, 0
      %s153 = sadd.s32 %s152, 1
      %s154 = scalar_select %p151, %s152, %s153
      %p157 = pneg %p151
      %p158 = scmp.eq.s32.totalorder %s27, 1
      %p159 = por %p157, %p158
      %p160 = scmp.ne.s32.totalorder %s152, %s155
      %p161 = scmp.eq.s32.totalorder %s27, 0
      %p162 = por %p160, %p161
      %p163 = scmp.ne.s32.totalorder %s152, %s155
      %p164 = scmp.eq.s32.totalorder %s32, 1
      %p165 = por %p163, %p164
      %p166 = scmp.ne.s32.totalorder %s155, %s156
      %p167 = scmp.eq.s32.totalorder %s32, 0
      %p168 = por %p166, %p167
      %p169 = scmp.ne.s32.totalorder %s155, %s156
      %p170 = scmp.eq.s32.totalorder %s33, 1
      %p171 = por %p169, %p170
      %p173 = scmp.ne.s32.totalorder %s156, %s172
      %p174 = scmp.eq.s32.totalorder %s33, 0
      %p175 = por %p173, %p174
      %s176 = ssub.s32 %s27, %s34
      %p177 = scmp.eq.s32.totalorder %s176, 0
      %s179 = sadd.s32 %s178, 1
      %s180 = scalar_select %p177, %s178, %s179
      %p183 = pneg %p177
      %p184 = scmp.eq.s32.totalorder %s27, 1
      %p185 = por %p183, %p184
      %p186 = scmp.ne.s32.totalorder %s178, %s181
      %p187 = scmp.eq.s32.totalorder %s27, 0
      %p188 = por %p186, %p187
      %p189 = scmp.ne.s32.totalorder %s178, %s181
      %p190 = scmp.eq.s32.totalorder %s32, 1
      %p191 = por %p189, %p190
      %p192 = scmp.ne.s32.totalorder %s181, %s182
      %p193 = scmp.eq.s32.totalorder %s32, 0
      %p194 = por %p192, %p193
      %p195 = scmp.ne.s32.totalorder %s181, %s182
      %p196 = scmp.eq.s32.totalorder %s33, 1
      %p197 = por %p195, %p196
      %p199 = scmp.ne.s32.totalorder %s182, %s198
      %p200 = scmp.eq.s32.totalorder %s33, 0
      %p201 = por %p199, %p200
      %s202 = ssub.s32 %s27, %s34
      %p203 = scmp.eq.s32.totalorder %s202, 0
      %s205 = sadd.s32 %s204, 1
      %s206 = scalar_select %p203, %s204, %s205
      %p209 = pneg %p203
      %p210 = scmp.eq.s32.totalorder %s27, 1
      %p211 = por %p209, %p210
      %p212 = scmp.ne.s32.totalorder %s204, %s207
      %p213 = scmp.eq.s32.totalorder %s27, 0
      %p214 = por %p212, %p213
      %p215 = scmp.ne.s32.totalorder %s204, %s207
      %p216 = scmp.eq.s32.totalorder %s32, 1
      %p217 = por %p215, %p216
      %p218 = scmp.ne.s32.totalorder %s207, %s208
      %p219 = scmp.eq.s32.totalorder %s32, 0
      %p220 = por %p218, %p219
      %p221 = scmp.ne.s32.totalorder %s207, %s208
      %p222 = scmp.eq.s32.totalorder %s33, 1
      %p223 = por %p221, %p222
      %p225 = scmp.ne.s32.totalorder %s208, %s224
      %p226 = scmp.eq.s32.totalorder %s33, 0
      %p227 = por %p225, %p226
      %s228 = ssub.s32 %s27, %s34
      %p229 = scmp.eq.s32.totalorder %s228, 0
      %s231 = sadd.s32 %s230, 1
      %s232 = scalar_select %p229, %s230, %s231
      %p235 = pneg %p229
      %p236 = scmp.eq.s32.totalorder %s27, 1
      %p237 = por %p235, %p236
      %p238 = scmp.ne.s32.totalorder %s230, %s233
      %p239 = scmp.eq.s32.totalorder %s27, 0
      %p240 = por %p238, %p239
      %p241 = scmp.ne.s32.totalorder %s230, %s233
      %p242 = scmp.eq.s32.totalorder %s32, 1
      %p243 = por %p241, %p242
      %p244 = scmp.ne.s32.totalorder %s233, %s234
      %p245 = scmp.eq.s32.totalorder %s32, 0
      %p246 = por %p244, %p245
      %p247 = scmp.ne.s32.totalorder %s233, %s234
      %p248 = scmp.eq.s32.totalorder %s33, 1
      %p249 = por %p247, %p248
      %p251 = scmp.ne.s32.totalorder %s234, %s250
      %p252 = scmp.eq.s32.totalorder %s33, 0
      %p253 = por %p251, %p252
      %s254 = ssub.s32 %s27, %s34
      %p255 = scmp.eq.s32.totalorder %s254, 0
      %s257 = sadd.s32 %s256, 1
      %s258 = scalar_select %p255, %s256, %s257
      %p261 = pneg %p255
      %p262 = scmp.eq.s32.totalorder %s27, 1
      %p263 = por %p261, %p262
      %p264 = scmp.ne.s32.totalorder %s256, %s259
      %p265 = scmp.eq.s32.totalorder %s27, 0
      %p266 = por %p264, %p265
      %p267 = scmp.ne.s32.totalorder %s256, %s259
      %p268 = scmp.eq.s32.totalorder %s32, 1
      %p269 = por %p267, %p268
      %p270 = scmp.ne.s32.totalorder %s259, %s260
      %p271 = scmp.eq.s32.totalorder %s32, 0
      %p272 = por %p270, %p271
      %p273 = scmp.ne.s32.totalorder %s259, %s260
      %p274 = scmp.eq.s32.totalorder %s33, 1
      %p275 = por %p273, %p274
      %p277 = scmp.ne.s32.totalorder %s260, %s276
      %p278 = scmp.eq.s32.totalorder %s33, 0
      %p279 = por %p277, %p278
      %s280 = ssub.s32 %s27, %s34
      %p281 = scmp.eq.s32.totalorder %s280, 0
      %s283 = sadd.s32 %s282, 1
      %s284 = scalar_select %p281, %s282, %s283
      %p287 = pneg %p281
      %p288 = scmp.eq.s32.totalorder %s27, 1
      %p289 = por %p287, %p288
      %p290 = scmp.ne.s32.totalorder %s282, %s285
      %p291 = scmp.eq.s32.totalorder %s27, 0
      %p292 = por %p290, %p291
      %p293 = scmp.ne.s32.totalorder %s282, %s285
      %p294 = scmp.eq.s32.totalorder %s32, 1
      %p295 = por %p293, %p294
      %p296 = scmp.ne.s32.totalorder %s285, %s286
      %p297 = scmp.eq.s32.totalorder %s32, 0
      %p298 = por %p296, %p297
      %p299 = scmp.ne.s32.totalorder %s285, %s286
      %p300 = scmp.eq.s32.totalorder %s33, 1
      %p301 = por %p299, %p300
      %p303 = scmp.ne.s32.totalorder %s286, %s302
      %p304 = scmp.eq.s32.totalorder %s33, 0
      %p305 = por %p303, %p304
      %s306 = ssub.s32 %s27, %s34
      %p307 = scmp.eq.s32.totalorder %s306, 0
      %s309 = sadd.s32 %s308, 1
      %s310 = scalar_select %p307, %s308, %s309
      %p313 = pneg %p307
      %p314 = scmp.eq.s32.totalorder %s27, 1
      %p315 = por %p313, %p314
      %p316 = scmp.ne.s32.totalorder %s308, %s311
      %p317 = scmp.eq.s32.totalorder %s27, 0
      %p318 = por %p316, %p317
      %p319 = scmp.ne.s32.totalorder %s308, %s311
      %p320 = scmp.eq.s32.totalorder %s32, 1
      %p321 = por %p319, %p320
      %p322 = scmp.ne.s32.totalorder %s311, %s312
      %p323 = scmp.eq.s32.totalorder %s32, 0
      %p324 = por %p322, %p323
      %p325 = scmp.ne.s32.totalorder %s311, %s312
      %p326 = scmp.eq.s32.totalorder %s33, 1
      %p327 = por %p325, %p326
      %p329 = scmp.ne.s32.totalorder %s312, %s328
      %p330 = scmp.eq.s32.totalorder %s33, 0
      %p331 = por %p329, %p330
      %s332 = ssub.s32 %s27, %s34
      %p333 = scmp.eq.s32.totalorder %s332, 0
      %s335 = sadd.s32 %s334, 1
      %s336 = scalar_select %p333, %s334, %s335
      %p339 = pneg %p333
      %p340 = scmp.eq.s32.totalorder %s27, 1
      %p341 = por %p339, %p340
      %p342 = scmp.ne.s32.totalorder %s334, %s337
      %p343 = scmp.eq.s32.totalorder %s27, 0
      %p344 = por %p342, %p343
      %p345 = scmp.ne.s32.totalorder %s334, %s337
      %p346 = scmp.eq.s32.totalorder %s32, 1
      %p347 = por %p345, %p346
      %p348 = scmp.ne.s32.totalorder %s337, %s338
      %p349 = scmp.eq.s32.totalorder %s32, 0
      %p350 = por %p348, %p349
      %p351 = scmp.ne.s32.totalorder %s337, %s338
      %p352 = scmp.eq.s32.totalorder %s33, 1
      %p353 = por %p351, %p352
      %p355 = scmp.ne.s32.totalorder %s338, %s354
      %p356 = scmp.eq.s32.totalorder %s33, 0
      %p357 = por %p355, %p356
      %s358 = ssub.s32 %s27, %s34
      %p359 = scmp.eq.s32.totalorder %s358, 0
      %s361 = sadd.s32 %s360, 1
      %s362 = scalar_select %p359, %s360, %s361
      %p365 = pneg %p359
      %p366 = scmp.eq.s32.totalorder %s27, 1
      %p367 = por %p365, %p366
      %p368 = scmp.ne.s32.totalorder %s360, %s363
      %p369 = scmp.eq.s32.totalorder %s27, 0
      %p370 = por %p368, %p369
      %p371 = scmp.ne.s32.totalorder %s360, %s363
      %p372 = scmp.eq.s32.totalorder %s32, 1
      %p373 = por %p371, %p372
      %p374 = scmp.ne.s32.totalorder %s363, %s364
      %p375 = scmp.eq.s32.totalorder %s32, 0
      %p376 = por %p374, %p375
      %p377 = scmp.ne.s32.totalorder %s363, %s364
      %p378 = scmp.eq.s32.totalorder %s33, 1
      %p379 = por %p377, %p378
      %p381 = scmp.ne.s32.totalorder %s364, %s380
      %p382 = scmp.eq.s32.totalorder %s33, 0
      %p383 = por %p381, %p382
      %s384 = ssub.s32 %s27, %s34
      %p385 = scmp.eq.s32.totalorder %s384, 0
      %s387 = sadd.s32 %s386, 1
      %s388 = scalar_select %p385, %s386, %s387
      %p391 = pneg %p385
      %p392 = scmp.eq.s32.totalorder %s27, 1
      %p393 = por %p391, %p392
      %p394 = scmp.ne.s32.totalorder %s386, %s389
      %p395 = scmp.eq.s32.totalorder %s27, 0
      %p396 = por %p394, %p395
      %p397 = scmp.ne.s32.totalorder %s386, %s389
      %p398 = scmp.eq.s32.totalorder %s32, 1
      %p399 = por %p397, %p398
      %p400 = scmp.ne.s32.totalorder %s389, %s390
      %p401 = scmp.eq.s32.totalorder %s32, 0
      %p402 = por %p400, %p401
      %p403 = scmp.ne.s32.totalorder %s389, %s390
      %p404 = scmp.eq.s32.totalorder %s33, 1
      %p405 = por %p403, %p404
      %p407 = scmp.ne.s32.totalorder %s390, %s406
      %p408 = scmp.eq.s32.totalorder %s33, 0
      %p409 = por %p407, %p408
      %s411 = sadd.s32 %s410, 1
      %p414 = scmp.eq.s32.totalorder %s27, 1
      %p415 = scmp.ne.s32.totalorder %s410, %s412
      %p416 = scmp.eq.s32.totalorder %s27, 0
      %p417 = por %p415, %p416
      %p418 = scmp.ne.s32.totalorder %s410, %s412
      %p419 = scmp.eq.s32.totalorder %s32, 1
      %p420 = por %p418, %p419
      %p421 = scmp.ne.s32.totalorder %s412, %s413
      %p422 = scmp.eq.s32.totalorder %s32, 0
      %p423 = por %p421, %p422
      %p424 = scmp.ne.s32.totalorder %s412, %s413
      %p425 = scmp.eq.s32.totalorder %s33, 1
      %p426 = por %p424, %p425
      %p428 = scmp.ne.s32.totalorder %s413, %s427
      %p429 = scmp.eq.s32.totalorder %s33, 0
      %p430 = por %p428, %p429
      %p431 = scmp.le.s32.totalorder 1, %s27
      %p432 = scmp.lt.s32.totalorder %s27, 3
      %p433 = pnand %p431, %p432
      %p434 = pneg %p433
      // Predicated region
      $region9: #{tpu_custom_call.1} parent=5 // pred_check
        _
      $region10: #{tpu_custom_call.1} parent=5 // pred_check_branch
        %436 = sbr.rel (%p433) target = $region12
      $region11: #{tpu_custom_call.1} parent=5 // pred_region
        %s437 = ssub.s32 %s27, 1
        // Predicated region
        $region13: #{tpu_custom_call.1} parent=11 // pred_check
          %p438 = pneg %p48
        $region14: #{tpu_custom_call.1} parent=11 // pred_check_branch
          %440 = sbr.rel (%p438) target = $region16
        $region15: #{tpu_custom_call.1} parent=11 // pred_region
          %442 = vsyncadd [#allocation5], 0
          %s443 = sshll.u32 %s0, 4
          %s444 = int_to_ptr.hbm [resolvable:$true] %s443
          %s445 = sshll.u32 [#allocation4], 4
          %s446 = int_to_ptr.vmem [resolvable:$true] %s445
          %451 = dma.hbm_to_vmem [thread:$0]  %s444, 256, %s446, [#allocation5], 128, 128, 8
        $region16: #{tpu_custom_call.1} parent=11 // pred_fallthru
          _
        // Predicated region
        $region17: #{tpu_custom_call.1} parent=11 // pred_check
          %p452 = pneg %p69
        $region18: #{tpu_custom_call.1} parent=11 // pred_check_branch
          %454 = sbr.rel (%p452) target = $region20
        $region19: #{tpu_custom_call.1} parent=11 // pred_region
          %456 = vsyncadd [#allocation8], 0
          %s458 = sshll.u32 %s1, 4
          %s459 = int_to_ptr.hbm [resolvable:$true] %s458
          %s460 = sshll.u32 [#allocation7], 4
          %s461 = int_to_ptr.vmem [resolvable:$true] %s460
          %463 = dma.hbm_to_vmem [thread:$0]  %s459, 128, %s461, [#allocation8]
        $region20: #{tpu_custom_call.1} parent=11 // pred_fallthru
          _
        // Predicated region
        $region21: #{tpu_custom_call.1} parent=11 // pred_check
          %p464 = pneg %p90
        $region22: #{tpu_custom_call.1} parent=11 // pred_check_branch
          %466 = sbr.rel (%p464) target = $region24
        $region23: #{tpu_custom_call.1} parent=11 // pred_region
          %468 = vsyncadd [#allocation8], 0
          %s470 = sshll.u32 %s2, 4
          %s471 = int_to_ptr.hbm [resolvable:$true] %s470
          %s472 = sshll.u32 [#allocation9], 4
          %s473 = int_to_ptr.vmem [resolvable:$true] %s472
          %475 = dma.hbm_to_vmem [thread:$0]  %s471, 128, %s473, [#allocation8]
        $region24: #{tpu_custom_call.1} parent=11 // pred_fallthru
          _
      $region12: #{tpu_custom_call.1} parent=5 // pred_fallthru
        _
      %p476 = scmp.lt.s32.totalorder %s27, 2
      // Predicated region
      $region25: #{tpu_custom_call.1} parent=5 // pred_check
        %p477 = pneg %p476
      $region26: #{tpu_custom_call.1} parent=5 // pred_check_branch
        %479 = sbr.rel (%p477) target = $region28
      $region27: #{tpu_custom_call.1} parent=5 // pred_region
        // Predicated region
        $region29: #{tpu_custom_call.1} parent=27 // pred_check
          %p480 = pneg %p110
        $region30: #{tpu_custom_call.1} parent=27 // pred_check_branch
          %482 = sbr.rel (%p480) target = $region32
        $region31: #{tpu_custom_call.1} parent=27 // pred_region
          %p483 = scmp.lt.s32.totalorder %s27, 1
          %s484 = scalar_select %p483, %s27, 1
          %s485 = smul.addr %s484, 4
          %s486 = smul.addr %s485, 4
          %s487 = scalar_lea.vmem %s3, %s486
        $region32: #{tpu_custom_call.1} parent=27 // pred_fallthru
          _
        // Predicated region
        $region33: #{tpu_custom_call.1} parent=27 // pred_check
          %p488 = pneg %p136
        $region34: #{tpu_custom_call.1} parent=27 // pred_check_branch
          %490 = sbr.rel (%p488) target = $region36
        $region35: #{tpu_custom_call.1} parent=27 // pred_region
          %p491 = scmp.lt.s32.totalorder %s27, 1
          %s492 = scalar_select %p491, %s27, 1
          %s493 = scalar_lea.vmem %s4, %s492
        $region36: #{tpu_custom_call.1} parent=27 // pred_fallthru
          _
        // Predicated region
        $region37: #{tpu_custom_call.1} parent=27 // pred_check
          %p494 = pneg %p162
        $region38: #{tpu_custom_call.1} parent=27 // pred_check_branch
          %496 = sbr.rel (%p494) target = $region40
        $region39: #{tpu_custom_call.1} parent=27 // pred_region
          %p497 = scmp.lt.s32.totalorder %s27, 1
          %s498 = scalar_select %p497, %s27, 1
          %s499 = smul.addr %s498, 4
          %s500 = smul.addr %s499, 4
          %s501 = scalar_lea.vmem %s5, %s500
        $region40: #{tpu_custom_call.1} parent=27 // pred_fallthru
          _
        // Predicated region
        $region41: #{tpu_custom_call.1} parent=27 // pred_check
          %p502 = pneg %p188
        $region42: #{tpu_custom_call.1} parent=27 // pred_check_branch
          %504 = sbr.rel (%p502) target = $region44
        $region43: #{tpu_custom_call.1} parent=27 // pred_region
          %p505 = scmp.lt.s32.totalorder %s27, 1
          %s506 = scalar_select %p505, %s27, 1
          %s507 = scalar_lea.vmem %s6, %s506
        $region44: #{tpu_custom_call.1} parent=27 // pred_fallthru
          _
        // Predicated region
        $region45: #{tpu_custom_call.1} parent=27 // pred_check
          %p508 = pneg %p214
        $region46: #{tpu_custom_call.1} parent=27 // pred_check_branch
          %510 = sbr.rel (%p508) target = $region48
        $region47: #{tpu_custom_call.1} parent=27 // pred_region
          %p511 = scmp.lt.s32.totalorder %s27, 1
          %s512 = scalar_select %p511, %s27, 1
          %s513 = smul.addr %s512, 4
          %s514 = smul.addr %s513, 4
          %s515 = scalar_lea.vmem %s7, %s514
        $region48: #{tpu_custom_call.1} parent=27 // pred_fallthru
          _
        // Predicated region
        $region49: #{tpu_custom_call.1} parent=27 // pred_check
          %p516 = pneg %p240
        $region50: #{tpu_custom_call.1} parent=27 // pred_check_branch
          %518 = sbr.rel (%p516) target = $region52
        $region51: #{tpu_custom_call.1} parent=27 // pred_region
          %p519 = scmp.lt.s32.totalorder %s27, 1
          %s520 = scalar_select %p519, %s27, 1
          %s521 = scalar_lea.vmem %s8, %s520
        $region52: #{tpu_custom_call.1} parent=27 // pred_fallthru
          _
        // Predicated region
        $region53: #{tpu_custom_call.1} parent=27 // pred_check
          %p522 = pneg %p266
        $region54: #{tpu_custom_call.1} parent=27 // pred_check_branch
          %524 = sbr.rel (%p522) target = $region56
        $region55: #{tpu_custom_call.1} parent=27 // pred_region
          %p525 = scmp.lt.s32.totalorder %s27, 1
          %s526 = scalar_select %p525, %s27, 1
          %s527 = smul.addr %s526, 8
          %s528 = smul.addr %s527, 4
          %s529 = scalar_lea.vmem %s9, %s528
        $region56: #{tpu_custom_call.1} parent=27 // pred_fallthru
          _
        // Predicated region
        $region57: #{tpu_custom_call.1} parent=27 // pred_check
          %p530 = pneg %p292
        $region58: #{tpu_custom_call.1} parent=27 // pred_check_branch
          %532 = sbr.rel (%p530) target = $region60
        $region59: #{tpu_custom_call.1} parent=27 // pred_region
          %p533 = scmp.lt.s32.totalorder %s27, 1
          %s534 = scalar_select %p533, %s27, 1
          %s535 = scalar_lea.vmem %s10, %s534
        $region60: #{tpu_custom_call.1} parent=27 // pred_fallthru
          _
        // Predicated region
        $region61: #{tpu_custom_call.1} parent=27 // pred_check
          %p536 = pneg %p318
        $region62: #{tpu_custom_call.1} parent=27 // pred_check_branch
          %538 = sbr.rel (%p536) target = $region64
        $region63: #{tpu_custom_call.1} parent=27 // pred_region
          %s539 = sand.u32 %s27, 1
          %s540 = scalar_lea.sflag [#allocation11], %s539
          %s541 = sand.u32 %s308, 1
          %s542 = scalar_lea.vmem [#allocation10], %s541
          %544 = vsyncadd %s540, 0
          %s545 = scalar_lea.hbm %s11, %s27
          %s547 = sshll.u32 %s545, 4
          %s548 = int_to_ptr.hbm [resolvable:$true] %s547
          %s549 = sshll.u32 %s542, 4
          %s550 = int_to_ptr.vmem [resolvable:$true] %s549
          %552 = dma.hbm_to_vmem [thread:$0]  %s548, 16, %s550, %s540
        $region64: #{tpu_custom_call.1} parent=27 // pred_fallthru
          _
        // Predicated region
        $region65: #{tpu_custom_call.1} parent=27 // pred_check
          %p553 = pneg %p344
        $region66: #{tpu_custom_call.1} parent=27 // pred_check_branch
          %555 = sbr.rel (%p553) target = $region68
        $region67: #{tpu_custom_call.1} parent=27 // pred_region
          %p556 = scmp.lt.s32.totalorder %s27, 1
          %s557 = scalar_select %p556, %s27, 1
          %s558 = scalar_lea.vmem %s12, %s557
        $region68: #{tpu_custom_call.1} parent=27 // pred_fallthru
          _
        // Predicated region
        $region69: #{tpu_custom_call.1} parent=27 // pred_check
          %p559 = pneg %p370
        $region70: #{tpu_custom_call.1} parent=27 // pred_check_branch
          %561 = sbr.rel (%p559) target = $region72
        $region71: #{tpu_custom_call.1} parent=27 // pred_region
          %s562 = sand.u32 %s27, 1
          %s563 = scalar_lea.sflag [#allocation11], %s562
          %s564 = sand.u32 %s360, 1
          %s565 = scalar_lea.vmem [#allocation12], %s564
          %567 = vsyncadd %s563, 0
          %s568 = scalar_lea.hbm %s13, %s27
          %s570 = sshll.u32 %s568, 4
          %s571 = int_to_ptr.hbm [resolvable:$true] %s570
          %s572 = sshll.u32 %s565, 4
          %s573 = int_to_ptr.vmem [resolvable:$true] %s572
          %575 = dma.hbm_to_vmem [thread:$0]  %s571, 16, %s573, %s563
        $region72: #{tpu_custom_call.1} parent=27 // pred_fallthru
          _
        // Predicated region
        $region73: #{tpu_custom_call.1} parent=27 // pred_check
          %p576 = pneg %p396
        $region74: #{tpu_custom_call.1} parent=27 // pred_check_branch
          %578 = sbr.rel (%p576) target = $region76
        $region75: #{tpu_custom_call.1} parent=27 // pred_region
          %p579 = scmp.lt.s32.totalorder %s27, 1
          %s580 = scalar_select %p579, %s27, 1
          %s581 = scalar_lea.vmem %s14, %s580
        $region76: #{tpu_custom_call.1} parent=27 // pred_fallthru
          _
      $region28: #{tpu_custom_call.1} parent=5 // pred_fallthru
        _
      %p582 = scmp.le.s32.totalorder 1, %s27
      %p583 = scmp.lt.s32.totalorder %s27, 3
      %p584 = pnand %p582, %p583
      %p585 = pneg %p584
      // Predicated region
      $region77: #{tpu_custom_call.1} parent=5 // pred_check
        _
      $region78: #{tpu_custom_call.1} parent=5 // pred_check_branch
        %587 = sbr.rel (%p584) target = $region80
      $region79: #{tpu_custom_call.1} parent=5 // pred_region
        %s588 = ssub.s32 %s27, 1
        // Predicated region
        $region81: #{tpu_custom_call.1} parent=79 // pred_check
          %p589 = pneg %p48
        $region82: #{tpu_custom_call.1} parent=79 // pred_check_branch
          %591 = sbr.rel (%p589) target = $region84
        $region83: #{tpu_custom_call.1} parent=79 // pred_region
          %593 = dma.done [#allocation5], 256
        $region84: #{tpu_custom_call.1} parent=79 // pred_fallthru
          _
        // Predicated region
        $region85: #{tpu_custom_call.1} parent=79 // pred_check
          %p594 = pneg %p69
        $region86: #{tpu_custom_call.1} parent=79 // pred_check_branch
          %596 = sbr.rel (%p594) target = $region88
        $region87: #{tpu_custom_call.1} parent=79 // pred_region
          %598 = dma.done [#allocation8], 128
        $region88: #{tpu_custom_call.1} parent=79 // pred_fallthru
          _
        // Predicated region
        $region89: #{tpu_custom_call.1} parent=79 // pred_check
          %p599 = pneg %p90
        $region90: #{tpu_custom_call.1} parent=79 // pred_check_branch
          %601 = sbr.rel (%p599) target = $region92
        $region91: #{tpu_custom_call.1} parent=79 // pred_region
          %603 = dma.done [#allocation8], 128
        $region92: #{tpu_custom_call.1} parent=79 // pred_fallthru
          _
        %s604 = sand.u32 %s32, 1
        %s605 = scalar_lea.sflag [#allocation11], %s604
        %s606 = sand.u32 %s311, 1
        %s607 = scalar_lea.vmem [#allocation10], %s606
        // Predicated region
        $region93: #{tpu_custom_call.1} parent=79 // pred_check
          %p608 = pneg %p324
        $region94: #{tpu_custom_call.1} parent=79 // pred_check_branch
          %610 = sbr.rel (%p608) target = $region96
        $region95: #{tpu_custom_call.1} parent=79 // pred_region
          %612 = dma.done %s605, 16
        $region96: #{tpu_custom_call.1} parent=79 // pred_fallthru
          _
        %s613 = sand.u32 %s32, 1
        %s614 = scalar_lea.sflag [#allocation11], %s613
        %s615 = sand.u32 %s363, 1
        %s616 = scalar_lea.vmem [#allocation12], %s615
        // Predicated region
        $region97: #{tpu_custom_call.1} parent=79 // pred_check
          %p617 = pneg %p376
        $region98: #{tpu_custom_call.1} parent=79 // pred_check_branch
          %619 = sbr.rel (%p617) target = $region100
        $region99: #{tpu_custom_call.1} parent=79 // pred_region
          %621 = dma.done %s614, 16
        $region100: #{tpu_custom_call.1} parent=79 // pred_fallthru
          _
        %p622 = pneg %p48
        %p623 = pneg %p45
        %p624 = pneg %p69
        %p625 = pneg %p66
        %p626 = pneg %p90
        %p627 = pneg %p87
        %p628 = scmp.lt.s32.totalorder %s32, 1
        %s629 = scalar_select %p628, %s32, 1
        %s630 = smul.addr %s629, 4
        %s631 = smul.addr %s630, 4
        %s632 = scalar_lea.vmem %s3, %s631
        %p633 = pneg %p116
        %p634 = pneg %p113
        %p635 = scmp.lt.s32.totalorder %s32, 1
        %s636 = scalar_select %p635, %s32, 1
        %s637 = scalar_lea.vmem %s4, %s636
        %p638 = pneg %p142
        %p639 = pneg %p139
        %p640 = scmp.lt.s32.totalorder %s32, 1
        %s641 = scalar_select %p640, %s32, 1
        %s642 = smul.addr %s641, 4
        %s643 = smul.addr %s642, 4
        %s644 = scalar_lea.vmem %s5, %s643
        %p645 = pneg %p168
        %p646 = pneg %p165
        %p647 = scmp.lt.s32.totalorder %s32, 1
        %s648 = scalar_select %p647, %s32, 1
        %s649 = scalar_lea.vmem %s6, %s648
        %p650 = pneg %p194
        %p651 = pneg %p191
        %p652 = scmp.lt.s32.totalorder %s32, 1
        %s653 = scalar_select %p652, %s32, 1
        %s654 = smul.addr %s653, 4
        %s655 = smul.addr %s654, 4
        %s656 = scalar_lea.vmem %s7, %s655
        %p657 = pneg %p220
        %p658 = pneg %p217
        %p659 = scmp.lt.s32.totalorder %s32, 1
        %s660 = scalar_select %p659, %s32, 1
        %s661 = scalar_lea.vmem %s8, %s660
        %p662 = pneg %p246
        %p663 = pneg %p243
        %p664 = scmp.lt.s32.totalorder %s32, 1
        %s665 = scalar_select %p664, %s32, 1
        %s666 = smul.addr %s665, 8
        %s667 = smul.addr %s666, 4
        %s668 = scalar_lea.vmem %s9, %s667
        %p669 = pneg %p272
        %p670 = pneg %p269
        %p671 = scmp.lt.s32.totalorder %s32, 1
        %s672 = scalar_select %p671, %s32, 1
        %s673 = scalar_lea.vmem %s10, %s672
        %p674 = pneg %p298
        %p675 = pneg %p295
        %s676 = sand.u32 %s32, 1
        %s677 = scalar_lea.sflag [#allocation11], %s676
        %s678 = sand.u32 %s311, 1
        %s679 = scalar_lea.vmem [#allocation10], %s678
        %p680 = pneg %p324
        %p681 = pneg %p321
        %p682 = scmp.lt.s32.totalorder %s32, 1
        %s683 = scalar_select %p682, %s32, 1
        %s684 = scalar_lea.vmem %s12, %s683
        %p685 = pneg %p350
        %p686 = pneg %p347
        %s687 = sand.u32 %s32, 1
        %s688 = scalar_lea.sflag [#allocation11], %s687
        %s689 = sand.u32 %s363, 1
        %s690 = scalar_lea.vmem [#allocation12], %s689
        %p691 = pneg %p376
        %p692 = pneg %p373
        %p693 = scmp.lt.s32.totalorder %s32, 1
        %s694 = scalar_select %p693, %s32, 1
        %s695 = scalar_lea.vmem %s14, %s694
        %p696 = pneg %p402
        %p697 = pneg %p399
        %p698 = pneg %p423
        %p699 = pneg %p420
        %p700 = scmp.lt.s32.totalorder %s32, 1
        %s701 = scalar_select %p700, %s32, 1
        %s702 = smul.addr %s701, 4
        %s703 = smul.addr %s702, 4
        %s704 = scalar_lea.vmem %s3, %s703
        %p705 = scmp.lt.s32.totalorder %s32, 1
        %s706 = scalar_select %p705, %s32, 1
        %s707 = scalar_lea.vmem %s4, %s706
        %p708 = scmp.lt.s32.totalorder %s32, 1
        %s709 = scalar_select %p708, %s32, 1
        %s710 = smul.addr %s709, 4
        %s711 = smul.addr %s710, 4
        %s712 = scalar_lea.vmem %s5, %s711
        %p713 = scmp.lt.s32.totalorder %s32, 1
        %s714 = scalar_select %p713, %s32, 1
        %s715 = scalar_lea.vmem %s6, %s714
        %p716 = scmp.lt.s32.totalorder %s32, 1
        %s717 = scalar_select %p716, %s32, 1
        %s718 = smul.addr %s717, 4
        %s719 = smul.addr %s718, 4
        %s720 = scalar_lea.vmem %s7, %s719
        %p721 = scmp.lt.s32.totalorder %s32, 1
        %s722 = scalar_select %p721, %s32, 1
        %s723 = scalar_lea.vmem %s8, %s722
        %p724 = scmp.lt.s32.totalorder %s32, 1
        %s725 = scalar_select %p724, %s32, 1
        %s726 = smul.addr %s725, 8
        %s727 = smul.addr %s726, 4
        %s728 = scalar_lea.vmem %s9, %s727
        %p729 = scmp.lt.s32.totalorder %s32, 1
        %s730 = scalar_select %p729, %s32, 1
        %s731 = scalar_lea.vmem %s10, %s730
        %p732 = scmp.lt.s32.totalorder %s32, 1
        %s733 = scalar_select %p732, %s32, 1
        %s734 = scalar_lea.vmem %s12, %s733
        %p735 = scmp.lt.s32.totalorder %s32, 1
        %s736 = scalar_select %p735, %s32, 1
        %s737 = scalar_lea.vmem %s14, %s736
        %p739 = scmp.eq.s32.totalorder %s32, 0
        // Predicated region
        $region101: #{tpu_custom_call.1} parent=79 // pred_check
          %p740 = pneg %p739
        $region102: #{tpu_custom_call.1} parent=79 // pred_check_branch
          %742 = sbr.rel (%p740) target = $region104
        $region103: #{tpu_custom_call.1} parent=79 // pred_region
          %v743 = vld [vmem:[#allocation4] sm:$0xff]
          %v744 = vld [vmem:[#allocation4 + $0x8] sm:$0xff]
          %v745 = vld [vmem:[#allocation7] sm:$0xff]
          %v746 = vadd.f32 %v743, %v745
          %v747 = vadd.f32 %v744, %v745
          %vm748 = vcmask 261120
          %749 = vst.msk [vmem:[#allocation2] sm:$0xff] %vm748, %v746
          %750 = vst.msk [vmem:[#allocation2 + $0x8] sm:$0xff] %vm748, %v747
        $region104: #{tpu_custom_call.1} parent=79 // pred_fallthru
          _
        %v751 = vld [vmem:[#allocation2] sm:$0xff]
        %v752 = vld [vmem:[#allocation2 + $0x8] sm:$0xff]
        %v753 = vpack.c.bf16 %v752, %v751
        %v754 = vld [vmem:[%s704] sm:$0xf]
        %v755 = vld [vmem:[%s704 + $0x4] sm:$0xf]
        %v756 = vld [vmem:[%s704 + $0x8] sm:$0xf]
        %v757 = vld [vmem:[%s704 + $0xc] sm:$0xf]
        %v758 = vld [vmem:[%s707] sm:$0x1]
        %v760 = vperm.slane %v758, 0
        %v766 = vunpack.c.l.b16 %v754
        %v767 = vunpack.c.l.b16 %v755
        %v768 = vunpack.c.l.b16 %v756
        %v769 = vunpack.c.l.b16 %v757
        %v770 = vpack.c.b16 %v767, %v766
        %v771 = vpack.c.b16 %v769, %v768
        %vm774 = vcmask 261120
        %v776 = vsel %vm774, %v753, 0
        %778 = vmatpush.bf16.msra.mxu0 0
        %779 = vmatpush.bf16.msra.mxu0 0
        %780 = vmatpush.bf16.msra.mxu0 0
        %781 = vmatpush.bf16.msra.mxu0 0
        %782 = vmatpush.bf16.msra.mxu0 0
        %783 = vmatpush.bf16.msra.mxu0 0
        %784 = vmatpush.bf16.msra.mxu0 %v771
        %785 = vmatpush.bf16.msra.mxu0 %v770
        %786 = vmatmul.bf16.gmra.mxu0 %v776
        %v787 = vpop.f32.mrf.mxu0
        %v788 = vadd.f32 %v760, %v787
        %v789 = vpop.f32.mrf.mxu0
        %v790 = vadd.f32 %v760, %v789
        %791 = vdwg.mxu0
        %v792 = vld [vmem:[#allocation9] sm:$0xff]
        %v793 = vpack.c.bf16 %v788, %v788
        %v794 = vpack.c.bf16 %v790, %v790
        %v796 = vunpack.c.l.b16 %v793
        %v797 = vpack.c.b16 %v796, %v796
        %798 = vrot.lane.b32.xlu0 %v797, 96
        %v799 = vpop.permute.xlu0 %798
        %vm800 = vcmask 64512
        %v802 = vsel %vm800, %v793, 0
        %v805 = vsel %vm800, %v799, 0
        %807 = vmatpush.bf16.xpose.msra.mxu0 0
        %808 = vmatpush.bf16.xpose.msra.mxu0 0
        %809 = vmatpush.bf16.xpose.msra.mxu0 0
        %810 = vmatpush.bf16.xpose.msra.mxu0 0
        %811 = vmatpush.bf16.xpose.msra.mxu0 0
        %812 = vmatpush.bf16.xpose.msra.mxu0 0
        %813 = vmatpush.bf16.xpose.msra.mxu0 0
        %814 = vmatpush.bf16.xpose.msra.mxu0 %v805
        %815 = vmatmul.bf16.gmra.mxu0 %v802
        %v816 = vpop.f32.mrf.mxu0
        %v817 = vadd.f32 0.0, %v816
        %v818 = vpop.f32.mrf.mxu0
        %819 = vdwg.mxu0
        %v821 = vunpack.c.l.b16 %v794
        %v822 = vpack.c.b16 %v821, %v821
        %823 = vrot.lane.b32.xlu0 %v822, 96
        %v824 = vpop.permute.xlu0 %823
        %v826 = vsel %vm800, %v794, 0
        %v829 = vsel %vm800, %v824, 0
        %831 = vmatpush.bf16.xpose.msra.mxu0 0
        %832 = vmatpush.bf16.xpose.msra.mxu0 0
        %833 = vmatpush.bf16.xpose.msra.mxu0 0
        %834 = vmatpush.bf16.xpose.msra.mxu0 0
        %835 = vmatpush.bf16.xpose.msra.mxu0 0
        %836 = vmatpush.bf16.xpose.msra.mxu0 0
        %837 = vmatpush.bf16.xpose.msra.mxu0 0
        %838 = vmatpush.bf16.xpose.msra.mxu0 %v829
        %839 = vmatmul.bf16.gmra.mxu0 %v826
        %v840 = vpop.f32.mrf.mxu0
        %v841 = vadd.f32 0.0, %v840
        %v842 = vpop.f32.mrf.mxu0
        %843 = vdwg.mxu0
        %v844 = vmul.f32 %v817, 0.35355338
        %v845 = vmul.f32 %v841, 0.35355338
        %v846 = vadd.f32 %v844, %v792
        %v847 = vadd.f32 %v845, %v792
        %v848 = vsel %vm800, %v846, -inf
        %849 = vmax.xlane.f32.xlu0 %v848
        %v850 = vpop.xlane.xlu0 %849
        %v851 = vsel %vm800, %v847, -inf
        %852 = vmax.xlane.f32.xlu0 %v851
        %v853 = vpop.xlane.xlu0 %852
        %v854 = vsub.f32 %v846, %v850
        %v855 = vsub.f32 %v847, %v853
        %v856 = vmul.f32 %v854, 1.442695
        %v857 = vpow.pop %v856
        %v858 = vmul.f32 %v855, 1.442695
        %v859 = vpow.pop %v858
        %v860 = vsel %vm800, %v857, 0.0
        %861 = vadd.xlane.f32.xlu0 %v860
        %v862 = vpop.xlane.xlu0 %861
        %v863 = vsel %vm800, %v859, 0.0
        %864 = vadd.xlane.f32.xlu0 %v863
        %v865 = vpop.xlane.xlu0 %864
        %v866 = vrcp.pop %v862
        %v867 = vrcp.pop %v865
        %v868 = vmul.f32 %v857, %v866
        %v869 = vmul.f32 %v859, %v867
        %v870 = vpack.c.bf16 %v868, %v868
        %v871 = vpack.c.bf16 %v869, %v869
        %872 = vrot.lane.b32.xlu0 %v797, 64
        %v873 = vpop.permute.xlu0 %872
        %v875 = vsel %vm800, %v870, 0
        %vm877 = vcmask 1043456
        %v879 = vsel %vm877, %v873, 0
        %881 = vmatpush.bf16.msra.mxu0 0
        %882 = vmatpush.bf16.msra.mxu0 0
        %883 = vmatpush.bf16.msra.mxu0 0
        %884 = vmatpush.bf16.msra.mxu0 0
        %885 = vmatpush.bf16.msra.mxu0 0
        %886 = vmatpush.bf16.msra.mxu0 0
        %887 = vmatpush.bf16.msra.mxu0 0
        %888 = vmatpush.bf16.msra.mxu0 %v879
        %889 = vmatmul.bf16.gmra.mxu0 %v875
        %v890 = vpop.f32.mrf.mxu0
        %v891 = vadd.f32 0.0, %v890
        %v892 = vpop.f32.mrf.mxu0
        %893 = vdwg.mxu0
        %894 = vrot.lane.b32.xlu0 %v822, 64
        %v895 = vpop.permute.xlu0 %894
        %v897 = vsel %vm800, %v871, 0
        %v900 = vsel %vm877, %v895, 0
        %902 = vmatpush.bf16.msra.mxu0 0
        %903 = vmatpush.bf16.msra.mxu0 0
        %904 = vmatpush.bf16.msra.mxu0 0
        %905 = vmatpush.bf16.msra.mxu0 0
        %906 = vmatpush.bf16.msra.mxu0 0
        %907 = vmatpush.bf16.msra.mxu0 0
        %908 = vmatpush.bf16.msra.mxu0 0
        %909 = vmatpush.bf16.msra.mxu0 %v900
        %910 = vmatmul.bf16.gmra.mxu0 %v897
        %v911 = vpop.f32.mrf.mxu0
        %v912 = vadd.f32 0.0, %v911
        %v913 = vpop.f32.mrf.mxu0
        %914 = vdwg.mxu0
        %915 = vst.msk [vmem:[#allocation3] sm:$0xff] %vm800, %v891
        %916 = vst.msk [vmem:[#allocation3 + $0x8] sm:$0xff] %vm800, %v912
        %917 = vrot.lane.b32.xlu0 %v797, 120
        %v918 = vpop.permute.xlu0 %917
        %919 = vrot.lane.b32.xlu0 %v797, 88
        %v920 = vpop.permute.xlu0 %919
        %v922 = vsel %vm800, %v918, 0
        %v925 = vsel %vm800, %v920, 0
        %927 = vmatpush.bf16.xpose.msra.mxu0 0
        %928 = vmatpush.bf16.xpose.msra.mxu0 0
        %929 = vmatpush.bf16.xpose.msra.mxu0 0
        %930 = vmatpush.bf16.xpose.msra.mxu0 0
        %931 = vmatpush.bf16.xpose.msra.mxu0 0
        %932 = vmatpush.bf16.xpose.msra.mxu0 0
        %933 = vmatpush.bf16.xpose.msra.mxu0 0
        %934 = vmatpush.bf16.xpose.msra.mxu0 %v925
        %935 = vmatmul.bf16.gmra.mxu0 %v922
        %v936 = vpop.f32.mrf.mxu0
        %v937 = vadd.f32 0.0, %v936
        %v938 = vpop.f32.mrf.mxu0
        %939 = vdwg.mxu0
        %940 = vrot.lane.b32.xlu0 %v822, 120
        %v941 = vpop.permute.xlu0 %940
        %942 = vrot.lane.b32.xlu0 %v822, 88
        %v943 = vpop.permute.xlu0 %942
        %v945 = vsel %vm800, %v941, 0
        %v948 = vsel %vm800, %v943, 0
        %950 = vmatpush.bf16.xpose.msra.mxu0 0
        %951 = vmatpush.bf16.xpose.msra.mxu0 0
        %952 = vmatpush.bf16.xpose.msra.mxu0 0
        %953 = vmatpush.bf16.xpose.msra.mxu0 0
        %954 = vmatpush.bf16.xpose.msra.mxu0 0
        %955 = vmatpush.bf16.xpose.msra.mxu0 0
        %956 = vmatpush.bf16.xpose.msra.mxu0 0
        %957 = vmatpush.bf16.xpose.msra.mxu0 %v948
        %958 = vmatmul.bf16.gmra.mxu0 %v945
        %v959 = vpop.f32.mrf.mxu0
        %v960 = vadd.f32 0.0, %v959
        %v961 = vpop.f32.mrf.mxu0
        %962 = vdwg.mxu0
        %v963 = vmul.f32 %v937, 0.35355338
        %v964 = vmul.f32 %v960, 0.35355338
        %v965 = vadd.f32 %v963, %v792
        %v966 = vadd.f32 %v964, %v792
        %v967 = vsel %vm800, %v965, -inf
        %968 = vmax.xlane.f32.xlu0 %v967
        %v969 = vpop.xlane.xlu0 %968
        %v970 = vsel %vm800, %v966, -inf
        %971 = vmax.xlane.f32.xlu0 %v970
        %v972 = vpop.xlane.xlu0 %971
        %v973 = vsub.f32 %v965, %v969
        %v974 = vsub.f32 %v966, %v972
        %v975 = vmul.f32 %v973, 1.442695
        %v976 = vpow.pop %v975
        %v977 = vmul.f32 %v974, 1.442695
        %v978 = vpow.pop %v977
        %v979 = vsel %vm800, %v976, 0.0
        %980 = vadd.xlane.f32.xlu0 %v979
        %v981 = vpop.xlane.xlu0 %980
        %v982 = vsel %vm800, %v978, 0.0
        %983 = vadd.xlane.f32.xlu0 %v982
        %v984 = vpop.xlane.xlu0 %983
        %v985 = vrcp.pop %v981
        %v986 = vrcp.pop %v984
        %v987 = vmul.f32 %v976, %v985
        %v988 = vmul.f32 %v978, %v986
        %v989 = vpack.c.bf16 %v987, %v987
        %v990 = vpack.c.bf16 %v988, %v988
        %991 = vrot.lane.b32.xlu0 %v797, 56
        %v992 = vpop.permute.xlu0 %991
        %v994 = vsel %vm800, %v989, 0
        %v997 = vsel %vm877, %v992, 0
        %999 = vmatpush.bf16.msra.mxu0 0
        %1000 = vmatpush.bf16.msra.mxu0 0
        %1001 = vmatpush.bf16.msra.mxu0 0
        %1002 = vmatpush.bf16.msra.mxu0 0
        %1003 = vmatpush.bf16.msra.mxu0 0
        %1004 = vmatpush.bf16.msra.mxu0 0
        %1005 = vmatpush.bf16.msra.mxu0 0
        %1006 = vmatpush.bf16.msra.mxu0 %v997
        %1007 = vmatmul.bf16.gmra.mxu0 %v994
        %v1008 = vpop.f32.mrf.mxu0
        %v1009 = vadd.f32 0.0, %v1008
        %v1010 = vpop.f32.mrf.mxu0
        %1011 = vdwg.mxu0
        %1012 = vrot.lane.b32.xlu0 %v822, 56
        %v1013 = vpop.permute.xlu0 %1012
        %v1015 = vsel %vm800, %v990, 0
        %v1018 = vsel %vm877, %v1013, 0
        %1020 = vmatpush.bf16.msra.mxu0 0
        %1021 = vmatpush.bf16.msra.mxu0 0
        %1022 = vmatpush.bf16.msra.mxu0 0
        %1023 = vmatpush.bf16.msra.mxu0 0
        %1024 = vmatpush.bf16.msra.mxu0 0
        %1025 = vmatpush.bf16.msra.mxu0 0
        %1026 = vmatpush.bf16.msra.mxu0 0
        %1027 = vmatpush.bf16.msra.mxu0 %v1018
        %1028 = vmatmul.bf16.gmra.mxu0 %v1015
        %v1029 = vpop.f32.mrf.mxu0
        %v1030 = vadd.f32 0.0, %v1029
        %v1031 = vpop.f32.mrf.mxu0
        %1032 = vdwg.mxu0
        %1035 = vrot.lane.b32.xlu0 %v1009, 8
        %v1036 = vpop.permute.xlu0 %1035
        %1037 = vrot.lane.b32.xlu0 %v1030, 8
        %v1038 = vpop.permute.xlu0 %1037
        %vm1041 = vcmask 130112
        %1042 = vst.msk [vmem:[#allocation3] sm:$0xff] %vm1041, %v1036
        %1043 = vst.msk [vmem:[#allocation3 + $0x8] sm:$0xff] %vm1041, %v1038
        %1044 = vrot.lane.b32.xlu0 %v797, 112
        %v1045 = vpop.permute.xlu0 %1044
        %1046 = vrot.lane.b32.xlu0 %v797, 80
        %v1047 = vpop.permute.xlu0 %1046
        %v1049 = vsel %vm800, %v1045, 0
        %v1052 = vsel %vm800, %v1047, 0
        %1054 = vmatpush.bf16.xpose.msra.mxu0 0
        %1055 = vmatpush.bf16.xpose.msra.mxu0 0
        %1056 = vmatpush.bf16.xpose.msra.mxu0 0
        %1057 = vmatpush.bf16.xpose.msra.mxu0 0
        %1058 = vmatpush.bf16.xpose.msra.mxu0 0
        %1059 = vmatpush.bf16.xpose.msra.mxu0 0
        %1060 = vmatpush.bf16.xpose.msra.mxu0 0
        %1061 = vmatpush.bf16.xpose.msra.mxu0 %v1052
        %1062 = vmatmul.bf16.gmra.mxu0 %v1049
        %v1063 = vpop.f32.mrf.mxu0
        %v1064 = vadd.f32 0.0, %v1063
        %v1065 = vpop.f32.mrf.mxu0
        %1066 = vdwg.mxu0
        %1067 = vrot.lane.b32.xlu0 %v822, 112
        %v1068 = vpop.permute.xlu0 %1067
        %1069 = vrot.lane.b32.xlu0 %v822, 80
        %v1070 = vpop.permute.xlu0 %1069
        %v1072 = vsel %vm800, %v1068, 0
        %v1075 = vsel %vm800, %v1070, 0
        %1077 = vmatpush.bf16.xpose.msra.mxu0 0
        %1078 = vmatpush.bf16.xpose.msra.mxu0 0
        %1079 = vmatpush.bf16.xpose.msra.mxu0 0
        %1080 = vmatpush.bf16.xpose.msra.mxu0 0
        %1081 = vmatpush.bf16.xpose.msra.mxu0 0
        %1082 = vmatpush.bf16.xpose.msra.mxu0 0
        %1083 = vmatpush.bf16.xpose.msra.mxu0 0
        %1084 = vmatpush.bf16.xpose.msra.mxu0 %v1075
        %1085 = vmatmul.bf16.gmra.mxu0 %v1072
        %v1086 = vpop.f32.mrf.mxu0
        %v1087 = vadd.f32 0.0, %v1086
        %v1088 = vpop.f32.mrf.mxu0
        %1089 = vdwg.mxu0
        %v1090 = vmul.f32 %v1064, 0.35355338
        %v1091 = vmul.f32 %v1087, 0.35355338
        %v1092 = vadd.f32 %v1090, %v792
        %v1093 = vadd.f32 %v1091, %v792
        %v1094 = vsel %vm800, %v1092, -inf
        %1095 = vmax.xlane.f32.xlu0 %v1094
        %v1096 = vpop.xlane.xlu0 %1095
        %v1097 = vsel %vm800, %v1093, -inf
        %1098 = vmax.xlane.f32.xlu0 %v1097
        %v1099 = vpop.xlane.xlu0 %1098
        %v1100 = vsub.f32 %v1092, %v1096
        %v1101 = vsub.f32 %v1093, %v1099
        %v1102 = vmul.f32 %v1100, 1.442695
        %v1103 = vpow.pop %v1102
        %v1104 = vmul.f32 %v1101, 1.442695
        %v1105 = vpow.pop %v1104
        %v1106 = vsel %vm800, %v1103, 0.0
        %1107 = vadd.xlane.f32.xlu0 %v1106
        %v1108 = vpop.xlane.xlu0 %1107
        %v1109 = vsel %vm800, %v1105, 0.0
        %1110 = vadd.xlane.f32.xlu0 %v1109
        %v1111 = vpop.xlane.xlu0 %1110
        %v1112 = vrcp.pop %v1108
        %v1113 = vrcp.pop %v1111
        %v1114 = vmul.f32 %v1103, %v1112
        %v1115 = vmul.f32 %v1105, %v1113
        %v1116 = vpack.c.bf16 %v1114, %v1114
        %v1117 = vpack.c.bf16 %v1115, %v1115
        %1118 = vrot.lane.b32.xlu0 %v797, 48
        %v1119 = vpop.permute.xlu0 %1118
        %v1121 = vsel %vm800, %v1116, 0
        %v1124 = vsel %vm877, %v1119, 0
        %1126 = vmatpush.bf16.msra.mxu0 0
        %1127 = vmatpush.bf16.msra.mxu0 0
        %1128 = vmatpush.bf16.msra.mxu0 0
        %1129 = vmatpush.bf16.msra.mxu0 0
        %1130 = vmatpush.bf16.msra.mxu0 0
        %1131 = vmatpush.bf16.msra.mxu0 0
        %1132 = vmatpush.bf16.msra.mxu0 0
        %1133 = vmatpush.bf16.msra.mxu0 %v1124
        %1134 = vmatmul.bf16.gmra.mxu0 %v1121
        %v1135 = vpop.f32.mrf.mxu0
        %v1136 = vadd.f32 0.0, %v1135
        %v1137 = vpop.f32.mrf.mxu0
        %1138 = vdwg.mxu0
        %1139 = vrot.lane.b32.xlu0 %v822, 48
        %v1140 = vpop.permute.xlu0 %1139
        %v1142 = vsel %vm800, %v1117, 0
        %v1145 = vsel %vm877, %v1140, 0
        %1147 = vmatpush.bf16.msra.mxu0 0
        %1148 = vmatpush.bf16.msra.mxu0 0
        %1149 = vmatpush.bf16.msra.mxu0 0
        %1150 = vmatpush.bf16.msra.mxu0 0
        %1151 = vmatpush.bf16.msra.mxu0 0
        %1152 = vmatpush.bf16.msra.mxu0 0
        %1153 = vmatpush.bf16.msra.mxu0 0
        %1154 = vmatpush.bf16.msra.mxu0 %v1145
        %1155 = vmatmul.bf16.gmra.mxu0 %v1142
        %v1156 = vpop.f32.mrf.mxu0
        %v1157 = vadd.f32 0.0, %v1156
        %v1158 = vpop.f32.mrf.mxu0
        %1159 = vdwg.mxu0
        %1162 = vrot.lane.b32.xlu0 %v1136, 16
        %v1163 = vpop.permute.xlu0 %1162
        %1164 = vrot.lane.b32.xlu0 %v1157, 16
        %v1165 = vpop.permute.xlu0 %1164
        %vm1168 = vcmask 195712
        %1169 = vst.msk [vmem:[#allocation3] sm:$0xff] %vm1168, %v1163
        %1170 = vst.msk [vmem:[#allocation3 + $0x8] sm:$0xff] %vm1168, %v1165
        %1171 = vrot.lane.b32.xlu0 %v797, 104
        %v1172 = vpop.permute.xlu0 %1171
        %1173 = vrot.lane.b32.xlu0 %v797, 72
        %v1174 = vpop.permute.xlu0 %1173
        %v1176 = vsel %vm800, %v1172, 0
        %v1179 = vsel %vm800, %v1174, 0
        %1181 = vmatpush.bf16.xpose.msra.mxu0 0
        %1182 = vmatpush.bf16.xpose.msra.mxu0 0
        %1183 = vmatpush.bf16.xpose.msra.mxu0 0
        %1184 = vmatpush.bf16.xpose.msra.mxu0 0
        %1185 = vmatpush.bf16.xpose.msra.mxu0 0
        %1186 = vmatpush.bf16.xpose.msra.mxu0 0
        %1187 = vmatpush.bf16.xpose.msra.mxu0 0
        %1188 = vmatpush.bf16.xpose.msra.mxu0 %v1179
        %1189 = vmatmul.bf16.gmra.mxu0 %v1176
        %v1190 = vpop.f32.mrf.mxu0
        %v1191 = vadd.f32 0.0, %v1190
        %v1192 = vpop.f32.mrf.mxu0
        %1193 = vdwg.mxu0
        %1194 = vrot.lane.b32.xlu0 %v822, 104
        %v1195 = vpop.permute.xlu0 %1194
        %1196 = vrot.lane.b32.xlu0 %v822, 72
        %v1197 = vpop.permute.xlu0 %1196
        %v1199 = vsel %vm800, %v1195, 0
        %v1202 = vsel %vm800, %v1197, 0
        %1204 = vmatpush.bf16.xpose.msra.mxu0 0
        %1205 = vmatpush.bf16.xpose.msra.mxu0 0
        %1206 = vmatpush.bf16.xpose.msra.mxu0 0
        %1207 = vmatpush.bf16.xpose.msra.mxu0 0
        %1208 = vmatpush.bf16.xpose.msra.mxu0 0
        %1209 = vmatpush.bf16.xpose.msra.mxu0 0
        %1210 = vmatpush.bf16.xpose.msra.mxu0 0
        %1211 = vmatpush.bf16.xpose.msra.mxu0 %v1202
        %1212 = vmatmul.bf16.gmra.mxu0 %v1199
        %v1213 = vpop.f32.mrf.mxu0
        %v1214 = vadd.f32 0.0, %v1213
        %v1215 = vpop.f32.mrf.mxu0
        %1216 = vdwg.mxu0
        %v1217 = vmul.f32 %v1191, 0.35355338
        %v1218 = vmul.f32 %v1214, 0.35355338
        %v1219 = vadd.f32 %v1217, %v792
        %v1220 = vadd.f32 %v1218, %v792
        %v1221 = vsel %vm800, %v1219, -inf
        %1222 = vmax.xlane.f32.xlu0 %v1221
        %v1223 = vpop.xlane.xlu0 %1222
        %v1224 = vsel %vm800, %v1220, -inf
        %1225 = vmax.xlane.f32.xlu0 %v1224
        %v1226 = vpop.xlane.xlu0 %1225
        %v1227 = vsub.f32 %v1219, %v1223
        %v1228 = vsub.f32 %v1220, %v1226
        %v1229 = vmul.f32 %v1227, 1.442695
        %v1230 = vpow.pop %v1229
        %v1231 = vmul.f32 %v1228, 1.442695
        %v1232 = vpow.pop %v1231
        %v1233 = vsel %vm800, %v1230, 0.0
        %1234 = vadd.xlane.f32.xlu0 %v1233
        %v1235 = vpop.xlane.xlu0 %1234
        %v1236 = vsel %vm800, %v1232, 0.0
        %1237 = vadd.xlane.f32.xlu0 %v1236
        %v1238 = vpop.xlane.xlu0 %1237
        %v1239 = vrcp.pop %v1235
        %v1240 = vrcp.pop %v1238
        %v1241 = vmul.f32 %v1230, %v1239
        %v1242 = vmul.f32 %v1232, %v1240
        %v1243 = vpack.c.bf16 %v1241, %v1241
        %v1244 = vpack.c.bf16 %v1242, %v1242
        %1245 = vrot.lane.b32.xlu0 %v797, 40
        %v1246 = vpop.permute.xlu0 %1245
        %v1248 = vsel %vm800, %v1243, 0
        %v1251 = vsel %vm877, %v1246, 0
        %1253 = vmatpush.bf16.msra.mxu0 0
        %1254 = vmatpush.bf16.msra.mxu0 0
        %1255 = vmatpush.bf16.msra.mxu0 0
        %1256 = vmatpush.bf16.msra.mxu0 0
        %1257 = vmatpush.bf16.msra.mxu0 0
        %1258 = vmatpush.bf16.msra.mxu0 0
        %1259 = vmatpush.bf16.msra.mxu0 0
        %1260 = vmatpush.bf16.msra.mxu0 %v1251
        %1261 = vmatmul.bf16.gmra.mxu0 %v1248
        %v1262 = vpop.f32.mrf.mxu0
        %v1263 = vadd.f32 0.0, %v1262
        %v1264 = vpop.f32.mrf.mxu0
        %1265 = vdwg.mxu0
        %1266 = vrot.lane.b32.xlu0 %v822, 40
        %v1267 = vpop.permute.xlu0 %1266
        %v1269 = vsel %vm800, %v1244, 0
        %v1272 = vsel %vm877, %v1267, 0
        %1274 = vmatpush.bf16.msra.mxu0 0
        %1275 = vmatpush.bf16.msra.mxu0 0
        %1276 = vmatpush.bf16.msra.mxu0 0
        %1277 = vmatpush.bf16.msra.mxu0 0
        %1278 = vmatpush.bf16.msra.mxu0 0
        %1279 = vmatpush.bf16.msra.mxu0 0
        %1280 = vmatpush.bf16.msra.mxu0 0
        %1281 = vmatpush.bf16.msra.mxu0 %v1272
        %1282 = vmatmul.bf16.gmra.mxu0 %v1269
        %v1283 = vpop.f32.mrf.mxu0
        %v1284 = vadd.f32 0.0, %v1283
        %v1285 = vpop.f32.mrf.mxu0
        %1286 = vdwg.mxu0
        %1289 = vrot.lane.b32.xlu0 %v1263, 24
        %v1290 = vpop.permute.xlu0 %1289
        %1291 = vrot.lane.b32.xlu0 %v1284, 24
        %v1292 = vpop.permute.xlu0 %1291
        %vm1295 = vcmask 261312
        %1296 = vst.msk [vmem:[#allocation3] sm:$0xff] %vm1295, %v1290
        %1297 = vst.msk [vmem:[#allocation3 + $0x8] sm:$0xff] %vm1295, %v1292
        %v1298 = vld [vmem:[#allocation3] sm:$0xff]
        %v1299 = vld [vmem:[#allocation3 + $0x8] sm:$0xff]
        %v1300 = vpack.c.bf16 %v1299, %v1298
        %v1301 = vld [vmem:[%s712] sm:$0xf]
        %v1302 = vld [vmem:[%s712 + $0x4] sm:$0xf]
        %v1303 = vld [vmem:[%s712 + $0x8] sm:$0xf]
        %v1304 = vld [vmem:[%s712 + $0xc] sm:$0xf]
        %v1305 = vld [vmem:[%s715] sm:$0x1]
        %v1307 = vperm.slane %v1305, 0
        %v1313 = vunpack.c.l.b16 %v1301
        %v1314 = vunpack.c.l.b16 %v1302
        %v1315 = vunpack.c.l.b16 %v1303
        %v1316 = vunpack.c.l.b16 %v1304
        %v1317 = vpack.c.b16 %v1314, %v1313
        %v1318 = vpack.c.b16 %v1316, %v1315
        %v1322 = vsel %vm774, %v1300, 0
        %1324 = vmatpush.bf16.msra.mxu0 0
        %1325 = vmatpush.bf16.msra.mxu0 0
        %1326 = vmatpush.bf16.msra.mxu0 0
        %1327 = vmatpush.bf16.msra.mxu0 0
        %1328 = vmatpush.bf16.msra.mxu0 0
        %1329 = vmatpush.bf16.msra.mxu0 0
        %1330 = vmatpush.bf16.msra.mxu0 %v1318
        %1331 = vmatpush.bf16.msra.mxu0 %v1317
        %1332 = vmatmul.bf16.gmra.mxu0 %v1322
        %v1333 = vpop.f32.mrf.mxu0
        %v1334 = vadd.f32 %v1307, %v1333
        %v1335 = vpop.f32.mrf.mxu0
        %v1336 = vadd.f32 %v1307, %v1335
        %1337 = vdwg.mxu0
        %v1338 = vadd.f32 %v751, %v1334
        %v1339 = vadd.f32 %v752, %v1336
        %v1340 = vld [vmem:[%s607] sm:$0x1]
        %v1341 = vld [vmem:[%s734] sm:$0x1]
        %v1342 = vsel %vm774, %v1338, 0.0
        %1343 = vadd.xlane.f32.xlu0 %v1342
        %v1344 = vpop.xlane.xlu0 %1343
        %v1345 = vsel %vm774, %v1339, 0.0
        %1346 = vadd.xlane.f32.xlu0 %v1345
        %v1347 = vpop.xlane.xlu0 %1346
        %v1348 = vrcp.pop 32.0
        %v1349 = vmul.f32 32.0, %v1348
        %v1350 = vsub.f32 1.0, %v1349
        %v1351 = vmul.f32 %v1348, %v1350
        %v1352 = vadd.f32 %v1348, %v1351
        %vm1353 = vweird.f32 %v1348
        %v1354 = vsel %vm1353, %v1348, %v1352
        %v1355 = vmul.f32 %v1344, %v1354
        %v1356 = vmul.f32 %v1347, %v1354
        %v1357 = vsub.f32 %v1338, %v1355
        %v1358 = vsub.f32 %v1339, %v1356
        %v1359 = vmul.f32 %v1357, %v1357
        %v1360 = vmul.f32 %v1358, %v1358
        %v1361 = vsel %vm774, %v1359, 0.0
        %1362 = vadd.xlane.f32.xlu0 %v1361
        %v1363 = vpop.xlane.xlu0 %1362
        %v1364 = vsel %vm774, %v1360, 0.0
        %1365 = vadd.xlane.f32.xlu0 %v1364
        %v1366 = vpop.xlane.xlu0 %1365
        %v1367 = vmul.f32 %v1363, %v1354
        %v1368 = vmul.f32 %v1366, %v1354
        %v1369 = vadd.f32 %v1367, 1e-05
        %v1370 = vadd.f32 %v1368, 1e-05
        %v1371 = vrsqrt.pop %v1369
        %v1372 = vmul.f32 %v1371, %v1369
        %v1373 = vmul.f32 %v1372, %v1371
        %v1374 = vmul.f32 0.5, %v1373
        %v1375 = vsub.f32 1.5, %v1374
        %v1376 = vmul.f32 %v1371, %v1375
        %vm1377 = vweird.f32 %v1369
        %vm1378 = vweird.f32 %v1371
        %vm1379 = vmor %vm1377, %vm1378
        %v1380 = vsel %vm1379, %v1371, %v1376
        %v1381 = vrsqrt.pop %v1370
        %v1382 = vmul.f32 %v1381, %v1370
        %v1383 = vmul.f32 %v1382, %v1381
        %v1384 = vmul.f32 0.5, %v1383
        %v1385 = vsub.f32 1.5, %v1384
        %v1386 = vmul.f32 %v1381, %v1385
        %vm1387 = vweird.f32 %v1370
        %vm1388 = vweird.f32 %v1381
        %vm1389 = vmor %vm1387, %vm1388
        %v1390 = vsel %vm1389, %v1381, %v1386
        %v1391 = vmul.f32 %v1357, %v1380
        %v1392 = vmul.f32 %v1358, %v1390
        %v1394 = vperm.slane %v1340, 0
        %v1396 = vmul.f32 %v1391, %v1394
        %v1397 = vmul.f32 %v1392, %v1394
        %v1399 = vperm.slane %v1341, 0
        %v1401 = vadd.f32 %v1396, %v1399
        %v1402 = vadd.f32 %v1397, %v1399
        %v1403 = vpack.c.bf16 %v1402, %v1401
        %v1404 = vld [vmem:[%s720] sm:$0xf]
        %v1405 = vld [vmem:[%s720 + $0x4] sm:$0xf]
        %v1406 = vld [vmem:[%s720 + $0x8] sm:$0xf]
        %v1407 = vld [vmem:[%s720 + $0xc] sm:$0xf]
        %v1408 = vld [vmem:[%s723] sm:$0x1]
        %v1410 = vperm.slane %v1408, 0
        %v1416 = vunpack.c.l.b16 %v1404
        %v1417 = vunpack.c.l.b16 %v1405
        %v1418 = vunpack.c.l.b16 %v1406
        %v1419 = vunpack.c.l.b16 %v1407
        %v1420 = vpack.c.b16 %v1417, %v1416
        %v1421 = vpack.c.b16 %v1419, %v1418
        %v1425 = vsel %vm774, %v1403, 0
        %1427 = vmatpush.bf16.msra.mxu0 0
        %1428 = vmatpush.bf16.msra.mxu0 0
        %1429 = vmatpush.bf16.msra.mxu0 0
        %1430 = vmatpush.bf16.msra.mxu0 0
        %1431 = vmatpush.bf16.msra.mxu0 0
        %1432 = vmatpush.bf16.msra.mxu0 0
        %1433 = vmatpush.bf16.msra.mxu0 %v1421
        %1434 = vmatpush.bf16.msra.mxu0 %v1420
        %1435 = vmatmul.bf16.gmra.mxu0 %v1425
        %v1436 = vpop.f32.mrf.mxu0
        %v1437 = vadd.f32 %v1410, %v1436
        %v1438 = vpop.f32.mrf.mxu0
        %v1439 = vadd.f32 %v1410, %v1438
        %1440 = vdwg.mxu0
        %v1441 = vmax.f32 %v1437, 0.0
        %v1442 = vmax.f32 %v1439, 0.0
        %v1443 = vpack.c.bf16 %v1442, %v1441
        %v1444 = vld [vmem:[%s728] sm:$0xf]
        %v1445 = vld [vmem:[%s728 + $0x4] sm:$0xf]
        %v1446 = vld [vmem:[%s728 + $0x8] sm:$0xf]
        %v1447 = vld [vmem:[%s728 + $0xc] sm:$0xf]
        %v1448 = vld [vmem:[%s728 + $0x10] sm:$0xf]
        %v1449 = vld [vmem:[%s728 + $0x14] sm:$0xf]
        %v1450 = vld [vmem:[%s728 + $0x18] sm:$0xf]
        %v1451 = vld [vmem:[%s728 + $0x1c] sm:$0xf]
        %v1452 = vld [vmem:[%s731] sm:$0x1]
        %v1454 = vperm.slane %v1452, 0
        %v1464 = vunpack.c.l.b16 %v1444
        %v1465 = vunpack.c.l.b16 %v1445
        %v1466 = vunpack.c.l.b16 %v1446
        %v1467 = vunpack.c.l.b16 %v1447
        %v1468 = vunpack.c.l.b16 %v1448
        %v1469 = vunpack.c.l.b16 %v1449
        %v1470 = vunpack.c.l.b16 %v1450
        %v1471 = vunpack.c.l.b16 %v1451
        %v1472 = vpack.c.b16 %v1465, %v1464
        %v1473 = vpack.c.b16 %v1467, %v1466
        %v1474 = vpack.c.b16 %v1469, %v1468
        %v1475 = vpack.c.b16 %v1471, %v1470
        %vm1480 = vcmask 523264
        %v1482 = vsel %vm1480, %v1443, 0
        %1484 = vmatpush.bf16.msra.mxu0 0
        %1485 = vmatpush.bf16.msra.mxu0 0
        %1486 = vmatpush.bf16.msra.mxu0 0
        %1487 = vmatpush.bf16.msra.mxu0 0
        %1488 = vmatpush.bf16.msra.mxu0 %v1475
        %1489 = vmatpush.bf16.msra.mxu0 %v1474
        %1490 = vmatpush.bf16.msra.mxu0 %v1473
        %1491 = vmatpush.bf16.msra.mxu0 %v1472
        %1492 = vmatmul.bf16.gmra.mxu0 %v1482
        %v1493 = vpop.f32.mrf.mxu0
        %v1494 = vadd.f32 %v1454, %v1493
        %v1495 = vpop.f32.mrf.mxu0
        %v1496 = vadd.f32 %v1454, %v1495
        %1497 = vdwg.mxu0
        %v1498 = vadd.f32 %v1401, %v1494
        %v1499 = vadd.f32 %v1402, %v1496
        %v1500 = vld [vmem:[%s616] sm:$0x1]
        %v1501 = vld [vmem:[%s737] sm:$0x1]
        %v1502 = vsel %vm774, %v1498, 0.0
        %1503 = vadd.xlane.f32.xlu0 %v1502
        %v1504 = vpop.xlane.xlu0 %1503
        %v1505 = vsel %vm774, %v1499, 0.0
        %1506 = vadd.xlane.f32.xlu0 %v1505
        %v1507 = vpop.xlane.xlu0 %1506
        %v1508 = vmul.f32 %v1504, %v1354
        %v1509 = vmul.f32 %v1507, %v1354
        %v1510 = vsub.f32 %v1498, %v1508
        %v1511 = vsub.f32 %v1499, %v1509
        %v1512 = vmul.f32 %v1510, %v1510
        %v1513 = vmul.f32 %v1511, %v1511
        %v1514 = vsel %vm774, %v1512, 0.0
        %1515 = vadd.xlane.f32.xlu0 %v1514
        %v1516 = vpop.xlane.xlu0 %1515
        %v1517 = vsel %vm774, %v1513, 0.0
        %1518 = vadd.xlane.f32.xlu0 %v1517
        %v1519 = vpop.xlane.xlu0 %1518
        %v1520 = vmul.f32 %v1516, %v1354
        %v1521 = vmul.f32 %v1519, %v1354
        %v1522 = vadd.f32 %v1520, 1e-05
        %v1523 = vadd.f32 %v1521, 1e-05
        %v1524 = vrsqrt.pop %v1522
        %v1525 = vmul.f32 %v1524, %v1522
        %v1526 = vmul.f32 %v1525, %v1524
        %v1527 = vmul.f32 0.5, %v1526
        %v1528 = vsub.f32 1.5, %v1527
        %v1529 = vmul.f32 %v1524, %v1528
        %vm1530 = vweird.f32 %v1522
        %vm1531 = vweird.f32 %v1524
        %vm1532 = vmor %vm1530, %vm1531
        %v1533 = vsel %vm1532, %v1524, %v1529
        %v1534 = vrsqrt.pop %v1523
        %v1535 = vmul.f32 %v1534, %v1523
        %v1536 = vmul.f32 %v1535, %v1534
        %v1537 = vmul.f32 0.5, %v1536
        %v1538 = vsub.f32 1.5, %v1537
        %v1539 = vmul.f32 %v1534, %v1538
        %vm1540 = vweird.f32 %v1523
        %vm1541 = vweird.f32 %v1534
        %vm1542 = vmor %vm1540, %vm1541
        %v1543 = vsel %vm1542, %v1534, %v1539
        %v1544 = vmul.f32 %v1510, %v1533
        %v1545 = vmul.f32 %v1511, %v1543
        %v1547 = vperm.slane %v1500, 0
        %v1549 = vmul.f32 %v1544, %v1547
        %v1550 = vmul.f32 %v1545, %v1547
        %v1552 = vperm.slane %v1501, 0
        %v1554 = vadd.f32 %v1549, %v1552
        %v1555 = vadd.f32 %v1550, %v1552
        %1556 = vst.msk [vmem:[#allocation2] sm:$0xff] %vm774, %v1554
        %1557 = vst.msk [vmem:[#allocation2 + $0x8] sm:$0xff] %vm774, %v1555
        %p1558 = scmp.eq.s32.totalorder %s32, 1
        // Predicated region
        $region105: #{tpu_custom_call.1} parent=79 // pred_check
          %p1559 = pneg %p1558
        $region106: #{tpu_custom_call.1} parent=79 // pred_check_branch
          %1561 = sbr.rel (%p1559) target = $region108
        $region107: #{tpu_custom_call.1} parent=79 // pred_region
          %1562 = vst.msk [vmem:[#allocation13] sm:$0xff] %vm774, %v1554
          %1563 = vst.msk [vmem:[#allocation13 + $0x8] sm:$0xff] %vm774, %v1555
        $region108: #{tpu_custom_call.1} parent=79 // pred_fallthru
          _
        // Predicated region
        $region109: #{tpu_custom_call.1} parent=79 // pred_check
          %p1564 = pneg %p420
        $region110: #{tpu_custom_call.1} parent=79 // pred_check_branch
          %1566 = sbr.rel (%p1564) target = $region112
        $region111: #{tpu_custom_call.1} parent=79 // pred_region
          %1568 = vsyncadd [#allocation6], 0
          %s1569 = sshll.u32 [#allocation13], 4
          %s1570 = int_to_ptr.vmem [resolvable:$true] %s1569
          %s1571 = sshll.u32 %s15, 4
          %s1572 = int_to_ptr.hbm [resolvable:$true] %s1571
          %1577 = dma.vmem_to_hbm [thread:$0]  %s1570, 256, %s1572, [#allocation6], 128, 128, 8
        $region112: #{tpu_custom_call.1} parent=79 // pred_fallthru
          _
        // Predicated region
        $region113: #{tpu_custom_call.1} parent=79 // pred_check
          %p1578 = pneg %p420
        $region114: #{tpu_custom_call.1} parent=79 // pred_check_branch
          %1580 = sbr.rel (%p1578) target = $region116
        $region115: #{tpu_custom_call.1} parent=79 // pred_region
          %1582 = dma.done [#allocation6], 256
        $region116: #{tpu_custom_call.1} parent=79 // pred_fallthru
          _
      $region80: #{tpu_custom_call.1} parent=5 // pred_fallthru
        _
      %p1583 = scmp.le.s32.totalorder 2, %s27
      // Predicated region
      $region117: #{tpu_custom_call.1} parent=5 // pred_check
        %p1584 = pneg %p1583
      $region118: #{tpu_custom_call.1} parent=5 // pred_check_branch
        %1586 = sbr.rel (%p1584) target = $region120
      $region119: #{tpu_custom_call.1} parent=5 // pred_region
        %s1587 = ssub.s32 %s27, 2
      $region120: #{tpu_custom_call.1} parent=5 // pred_fallthru
        _
    $region6: #{tpu_custom_call.1} parent=1 // loop_footer
      %s31 = sadd.s32 1, %s27
    $region7: #{tpu_custom_call.1} parent=1 // loop_footer_branch
      %26 = sbr.rel target = $region3
    $region8: #{tpu_custom_call.1} parent=1 // loop_exit
      _
    %1588 = vsyncpa [#allocation5], 1
    %s1589 = scalar_lea.sflag [#allocation5], 1
    %1590 = vsyncpa %s1589, 1
    %1591 = vsyncpa [#allocation8], 1
    %1592 = vsyncpa [#allocation11], 1
    %s1593 = scalar_lea.sflag [#allocation11], 1
    %1594 = vsyncpa %s1593, 1
    %1595 = vsyncpa [#allocation6], 1
    %s1596 = scalar_lea.sflag [#allocation6], 1
    %1597 = vsyncpa %s1596, 1

</llo_original>
